<compile_context>
chip_gen: v6e
topology: v6e:2x2x1
jax: 0.10.0
libtpu: 0.0.40
codegen_flags: <defaults>
</compile_context>

<pallas_src>
import functools

import jax
import jax.numpy as jnp
from jax.experimental import pallas as pl
from jax.experimental.pallas import tpu as pltpu


def _round_up(x, m):
    return ((x + m - 1) // m) * m


def _pick_tile_t(T_pad, cap, pad):
    """Largest 128-multiple divisor of T_pad that is <= cap but >= pad."""
    divs = [t for t in range(128, T_pad + 1, 128) if T_pad % t == 0]
    target = max(128, min(cap, T_pad), _round_up(max(pad, 1), 128))
    cands = [t for t in divs if t <= target]
    tile_t = cands[-1] if cands else divs[0]
    if tile_t < pad:
        bigger = [t for t in divs if t >= pad]
        # TODO(synk): multi-tile halo for receptive fields longer than T.
        assert bigger, "receptive field larger than the (padded) sequence"
        tile_t = bigger[0]
    return tile_t


def residual_block_kernel(x_ref,
                          wdil_ref, bdil_ref,
                          wfg_ref, bfg_ref,
                          wsr_ref, bsr_ref,
                          res_ref, skip_ref,
                          halo_ref,
                          *, kernel_size, dilation, pad_tile, cres, cskip,
                          fuse_taps):
    # x_ref:    (1, Cres, TILE_T)  bf16, current time tile
    # wdil_ref: fused (Cgate, k*Cres) or per-tap (k, Cgate, Cres), bf16
    # wfg_ref:  (2*Cres, Cgate) bf16   [filter | gate]
    # wsr_ref:  (Cskip+Cres, Cres) bf16 [skip | residual], BN folded
    # biases:   (*, 1) f32
    # halo_ref: (Cres, PAD_TILE) bf16 persistent scratch = tail of previous tile
    ti = pl.program_id(1)

    @pl.when(ti == 0)
    def _():  # first time tile of this sequence: causal history is zero
        halo_ref[...] = jnp.zeros_like(halo_ref)

    x = x_ref[0]                                   # (Cres, TILE_T) bf16
    tile_t = x.shape[-1]
    halo = halo_ref[...]                           # (Cres, PAD_TILE) bf16

    def tap_view(j):
        shift = (kernel_size - 1 - j) * dilation
        if shift == 0:
            return x
        # [last `shift` steps of previous tile | first tile_t-shift of this tile]
        return jnp.concatenate(
            [halo[:, pad_tile - shift:], x[:, :tile_t - shift]], axis=-1)

    if fuse_taps:
        # Channel-stacked single MXU matmul (only used when k*Cres fits MXU K).
        xstack = (tap_view(0) if kernel_size == 1 else
                  jnp.concatenate([tap_view(j) for j in range(kernel_size)],
                                  axis=0))
        dilated = (jnp.dot(wdil_ref[...], xstack,
                           preferred_element_type=jnp.float32)
                   + bdil_ref[...])                # (Cgate, TILE_T) f32
    else:
        acc = jnp.dot(wdil_ref[0], tap_view(0),
                      preferred_element_type=jnp.float32)
        for j in range(1, kernel_size):            # static, unrolled
            acc = acc + jnp.dot(wdil_ref[j], tap_view(j),
                                preferred_element_type=jnp.float32)
        dilated = acc + bdil_ref[...]              # (Cgate, TILE_T) f32

    # Fused filter|gate 1x1 convs (bf16 operands, f32 accumulate), gated act.
    fg = (jnp.dot(wfg_ref[...], dilated.astype(wfg_ref.dtype),
                  preferred_element_type=jnp.float32)
          + bfg_ref[...])                          # (2*Cres, TILE_T) f32
    gated = jnp.tanh(fg[:cres]) * jax.nn.sigmoid(fg[cres:])

    # BatchNorm (eval) folded into wsr/bsr; dropout is identity in eval.
    sr = (jnp.dot(wsr_ref[...], gated.astype(wsr_ref.dtype),
                  preferred_element_type=jnp.float32)
          + bsr_ref[...])                          # (Cskip+Cres, TILE_T) f32

    skip_ref[0] = sr[:cskip].astype(skip_ref.dtype)
    res_ref[0] = (sr[cskip:] + x.astype(jnp.float32)).astype(res_ref.dtype)

    # Carry the causal history (tail of this tile) to the next time tile.
    halo_ref[...] = x[:, tile_t - pad_tile:]


def residual_block_forward(x_nct, kparams, *, kernel_size, dilation,
                           tile_t=None, fuse_taps=None):
    """x_nct: (B, Cres, T) like PyTorch.  Returns (residual, skip) in NCT, f32."""
    B, Cres, T = x_nct.shape
    Cgate = kparams["b_dil"].shape[0]
    Csr = kparams["w_sr"].shape[0]
    Cskip = Csr - Cres
    pad = (kernel_size - 1) * dilation

    # Sublane-aligned channel splits (8 needed for the f32 slices, 16 preferred
    # for bf16 packing).  TODO(synk): pad channels when unaligned.
    assert Cres % 8 == 0 and Cskip % 8 == 0 and Cgate % 8 == 0

    compute_dtype = kparams["w_fg"].dtype           # bf16 MXU operands
    x = x_nct.astype(compute_dtype)

    # Lane-dense time axis: pad T up to a multiple of 128, slice afterwards.
    T_pad = _round_up(T, 128)
    if T_pad != T:
        x = jnp.pad(x, ((0, 0), (0, 0), (0, T_pad - T)))

    # Per-chip VMEM limit (v7x 64 MiB/TC -> 48 MiB; v5e/v6e 128 MiB -> 96 MiB).
    try:
        vmem_cap = int(pltpu.get_tpu_info().vmem_capacity_bytes)
    except Exception:
        vmem_cap = 64 * 1024 * 1024
    vmem_limit = max(min((vmem_cap * 3) // 4, 96 * 1024 * 1024),
                     32 * 1024 * 1024)

    pad_tile = _round_up(max(pad, 1), 128)
    isz = jnp.dtype(compute_dtype).itemsize
    weight_bytes = (2 * isz * (Cgate * kernel_size * Cres + 2 * Cres * Cgate
                               + Csr * Cres)
                    + 2 * 4 * (Cgate + 2 * Cres + Csr))
    halo_bytes = isz * Cres * pad_tile
    # Rough live bytes per time lane (double-buffered streams + intermediates).
    per_lane = (2 * isz * Cres                     # x tile (2 buffers)
                + 2 * 4 * Cres                     # residual out (2 buffers)
                + 2 * 4 * Cskip                    # skip out (2 buffers)
                + (kernel_size + 1) * isz * Cres   # shifted tap views
                + (4 + isz) * Cgate                # dilated f32 + bf16 cast
                + 8 * Cres                         # filter|gate f32
                + (4 + isz) * Cres                 # gated f32 + bf16 cast
                + 4 * Csr)                         # skip|residual f32
    budget = max(vmem_limit // 2 - weight_bytes - halo_bytes, 256 * 1024)
    cap = tile_t if tile_t is not None else min(budget // per_lane, 4096)
    tile_t = _pick_tile_t(T_pad, cap, pad)
    assert pad <= tile_t, "receptive field larger than one time tile"
    n_t = T_pad // tile_t

    if fuse_taps is None:
        # Fused channel-stacked matmul only while the stacked K fits the MXU.
        # TODO(synk): threshold should be 128 on v5e (4x 128x128 MXU).
        fuse_taps = kernel_size * Cres <= 256
    if fuse_taps:
        w_dil = kparams["w_dil_fused"]
        wdil_block, wdil_map = (Cgate, kernel_size * Cres), (lambda b, t: (0, 0))
    else:
        w_dil = kparams["w_dil_taps"]
        wdil_block, wdil_map = (kernel_size, Cgate, Cres), (lambda b, t: (0, 0, 0))

    x_map = lambda b, t: (b, 0, t)
    wmap = lambda b, t: (0, 0)

    kern = functools.partial(residual_block_kernel,
                             kernel_size=kernel_size, dilation=dilation,
                             pad_tile=pad_tile, cres=Cres, cskip=Cskip,
                             fuse_taps=fuse_taps)

    def build_and_run(single_buffer_weights):
        def wspec(shape, index_map):
            if single_buffer_weights:
                # Constant index_map -> DMA'd once; single buffer saves VMEM.
                return pl.BlockSpec(shape, index_map,
                                    pipeline_mode=pl.Buffered(1))
            return pl.BlockSpec(shape, index_map)

        grid_spec = pltpu.PrefetchScalarGridSpec(
            num_scalar_prefetch=0,
            grid=(B, n_t),
            in_specs=[
                pl.BlockSpec((1, Cres, tile_t), x_map),        # x (current tile)
                wspec(wdil_block, wdil_map),                   # dilated-conv W
                wspec((Cgate, 1), wmap),
                wspec((2 * Cres, Cgate), wmap),                # filter|gate W
                wspec((2 * Cres, 1), wmap),
                wspec((Csr, Cres), wmap),                      # skip|res W (BN folded)
                wspec((Csr, 1), wmap),
            ],
            out_specs=[
                pl.BlockSpec((1, Cres, tile_t), x_map),        # residual (NCT)
                pl.BlockSpec((1, Cskip, tile_t), x_map),       # skip     (NCT)
            ],
            scratch_shapes=[pltpu.VMEM((Cres, pad_tile), compute_dtype)],
        )
        return pl.pallas_call(
            kern,
            out_shape=(jax.ShapeDtypeStruct((B, Cres, T_pad), jnp.float32),
                       jax.ShapeDtypeStruct((B, Cskip, T_pad), jnp.float32)),
            grid_spec=grid_spec,
            compiler_params=pltpu.CompilerParams(
                dimension_semantics=("parallel", "arbitrary"),
                vmem_limit_bytes=int(vmem_limit)),
        )(x, w_dil, kparams["b_dil"], kparams["w_fg"], kparams["b_fg"],
          kparams["w_sr"], kparams["b_sr"])

    try:
        res, skip = build_and_run(True)
    except Exception:
        # TODO(synk): pl.Buffered(1) unsupported here; fall back to default
        # double-buffered weight operands (same semantics, slightly more VMEM).
        res, skip = build_and_run(False)

    if T_pad != T:
        res, skip = res[:, :, :T], skip[:, :, :T]
    return res, skip


def prepare_kernel_params(p, dtype=jnp.bfloat16):
    """Fold/stack the PyTorch-layout module params for the kernel (bf16 weights)."""
    Cgate, Cres, k = p["w_dil"].shape
    Cskip = p["w_skip"].shape[0]
    f32 = jnp.float32

    # dilated conv weights in both layouts used by the kernel
    w_dil_fused = jnp.transpose(p["w_dil"], (0, 2, 1)).reshape(
        Cgate, k * Cres).astype(dtype)                       # (Cgate, k*Cres)
    w_dil_taps = jnp.transpose(p["w_dil"], (2, 0, 1)).astype(dtype)  # (k,Cgate,Cres)
    b_dil = p["b_dil"].reshape(Cgate, 1).astype(f32)

    # fused filter|gate 1x1
    w_fg = jnp.concatenate([p["w_f"][:, :, 0], p["w_g"][:, :, 0]],
                           axis=0).astype(dtype)
    b_fg = jnp.concatenate([p["b_f"], p["b_g"]]).reshape(2 * Cres, 1).astype(f32)

    # BN (eval) folded into skip/residual 1x1, then fused skip|residual
    scale = (p["bn_gamma"] / jnp.sqrt(p["bn_var"] + p["bn_eps"])).astype(f32)
    shift = (p["bn_beta"] - p["bn_mean"] * scale).astype(f32)
    w_skip = p["w_skip"][:, :, 0].astype(f32)
    w_res = p["w_res"][:, :, 0].astype(f32)
    w_sr = jnp.concatenate([w_skip * scale[None, :], w_res * scale[None, :]],
                           axis=0).astype(dtype)
    b_sr = jnp.concatenate([p["b_skip"].astype(f32) + w_skip @ shift,
                            p["b_res"].astype(f32) + w_res @ shift]
                           ).reshape(Cskip + Cres, 1)
    return {"w_dil_fused": w_dil_fused, "w_dil_taps": w_dil_taps, "b_dil": b_dil,
            "w_fg": w_fg, "b_fg": b_fg, "w_sr": w_sr, "b_sr": b_sr}


def reference_forward(x, p, *, kernel_size, dilation):
    """Pure-JAX f32 reference mirroring the PyTorch module in eval mode (NCT)."""
    B, Cin, T = x.shape
    pad = (kernel_size - 1) * dilation
    xp = jnp.pad(x.astype(jnp.float32), ((0, 0), (0, 0), (pad, 0)))
    Cgate = p["w_dil"].shape[0]
    dil = jnp.zeros((B, Cgate, T), jnp.float32) + p["b_dil"][None, :, None]
    for j in range(kernel_size):
        xj = xp[:, :, j * dilation:j * dilation + T]
        dil = dil + jnp.einsum("oc,bct->bot", p["w_dil"][:, :, j], xj)
    filt = jnp.tanh(jnp.einsum("oc,bct->bot", p["w_f"][:, :, 0], dil)
                    + p["b_f"][None, :, None])
    gate = jax.nn.sigmoid(jnp.einsum("oc,bct->bot", p["w_g"][:, :, 0], dil)
                          + p["b_g"][None, :, None])
    gated = filt * gate
    scale = p["bn_gamma"] / jnp.sqrt(p["bn_var"] + p["bn_eps"])
    shift = p["bn_beta"] - p["bn_mean"] * scale
    gated = gated * scale[None, :, None] + shift[None, :, None]
    skip = (jnp.einsum("oc,bct->bot", p["w_skip"][:, :, 0], gated)
            + p["b_skip"][None, :, None])
    res = (jnp.einsum("oc,bct->bot", p["w_res"][:, :, 0], gated)
           + p["b_res"][None, :, None] + x)
    return res, skip


def make_params(key, residual_channels, gate_channels, skip_channels,
                kernel_size, eps=1e-5):
    ks = jax.random.split(key, 14)
    nrm = lambda k, s: (0.1 * jax.random.normal(k, s)).astype(jnp.float32)
    # PyTorch Conv1d weight layout: (Cout, Cin, K)
    return {
        "w_dil": nrm(ks[0], (gate_channels, residual_channels, kernel_size)),
        "b_dil": nrm(ks[1], (gate_channels,)),
        "w_f": nrm(ks[2], (residual_channels, gate_channels, 1)),
        "b_f": nrm(ks[3], (residual_channels,)),
        "w_g": nrm(ks[4], (residual_channels, gate_channels, 1)),
        "b_g": nrm(ks[5], (residual_channels,)),
        "w_skip": nrm(ks[6], (skip_channels, residual_channels, 1)),
        "b_skip": nrm(ks[7], (skip_channels,)),
        "w_res": nrm(ks[8], (residual_channels, residual_channels, 1)),
        "b_res": nrm(ks[9], (residual_channels,)),
        "bn_gamma": 1.0 + nrm(ks[10], (residual_channels,)),
        "bn_beta": nrm(ks[11], (residual_channels,)),
        "bn_mean": nrm(ks[12], (residual_channels,)),
        "bn_var": jax.random.uniform(ks[13], (residual_channels,),
                                     minval=0.5, maxval=1.5).astype(jnp.float32),
        "bn_eps": eps,
    }


if __name__ == "__main__":
    B = 2
    residual_channels = 16      # multiples of 16 -> clean bf16 sublane packing
    gate_channels = 32
    skip_channels = 16
    kernel_size = 2
    dilation = 4
    T = 256                     # two 128-wide time tiles when tile_t=128

    key = jax.random.PRNGKey(0)
    k_x, k_p = jax.random.split(key)
    x = jax.random.normal(k_x, (B, residual_channels, T), dtype=jnp.float32)
    params = make_params(k_p, residual_channels, gate_channels, skip_channels,
                         kernel_size)
    kparams = prepare_kernel_params(params)

    res_want, skip_want = reference_forward(x, params, kernel_size=kernel_size,
                                            dilation=dilation)

    runs = [
        dict(tile_t=128),                    # fused taps + carried-halo path
        dict(tile_t=128, fuse_taps=False),   # per-tap matmuls + carried-halo path
        dict(),                              # VMEM-budget-derived tile
    ]
    for kw in runs:
        residual, skip = residual_block_forward(
            x, kparams, kernel_size=kernel_size, dilation=dilation, **kw)
        jax.block_until_ready((residual, skip))
        assert residual.shape == (B, residual_channels, T)
        assert skip.shape == (B, skip_channels, T)
        # bf16 MXU operands -> relaxed tolerances vs. the f32 reference
        assert jnp.allclose(residual, res_want, atol=2e-2, rtol=2e-2), kw
        assert jnp.allclose(skip, skip_want, atol=2e-2, rtol=2e-2), kw

    print("KERNEL_OK")
</pallas_src>

<mosaic_0001>
module attributes {stable_mosaic.version = 11 : i64} {
  func.func @residual_block_kernel(%arg0: i32, %arg1: i32, %arg2: memref<1x16x128xbf16, #tpu.memory_space<vmem>>, %arg3: memref<32x32xbf16, #tpu.memory_space<vmem>>, %arg4: memref<32x1xf32, #tpu.memory_space<vmem>>, %arg5: memref<32x32xbf16, #tpu.memory_space<vmem>>, %arg6: memref<32x1xf32, #tpu.memory_space<vmem>>, %arg7: memref<32x16xbf16, #tpu.memory_space<vmem>>, %arg8: memref<32x1xf32, #tpu.memory_space<vmem>>, %arg9: memref<1x16x128xf32, #tpu.memory_space<vmem>>, %arg10: memref<1x16x128xf32, #tpu.memory_space<vmem>>, %arg11: memref<16x128xbf16, #tpu.memory_space<vmem>>) attributes {dimension_semantics = [#tpu.dimension_semantics<parallel>, #tpu.dimension_semantics<arbitrary>], iteration_bounds = array<i64: 2, 2>, scalar_prefetch = 0 : i64, scratch_operands = 1 : i64, tpu.core_type = #tpu.core_type<tc>, window_params = [{transform_indices = @transform_0, window_bounds = array<i64: 1, 16, 128>}, {pipeline_mode = #tpu.pipeline_mode<synchronous>, transform_indices = @transform_1, window_bounds = array<i64: 32, 32>}, {pipeline_mode = #tpu.pipeline_mode<synchronous>, transform_indices = @transform_2, window_bounds = array<i64: 32, 1>}, {pipeline_mode = #tpu.pipeline_mode<synchronous>, transform_indices = @transform_3, window_bounds = array<i64: 32, 32>}, {pipeline_mode = #tpu.pipeline_mode<synchronous>, transform_indices = @transform_4, window_bounds = array<i64: 32, 1>}, {pipeline_mode = #tpu.pipeline_mode<synchronous>, transform_indices = @transform_5, window_bounds = array<i64: 32, 16>}, {pipeline_mode = #tpu.pipeline_mode<synchronous>, transform_indices = @transform_6, window_bounds = array<i64: 32, 1>}, {transform_indices = @transform_7, window_bounds = array<i64: 1, 16, 128>}, {transform_indices = @transform_8, window_bounds = array<i64: 1, 16, 128>}]} {
    %c0_i32 = arith.constant 0 : i32
    %0 = arith.cmpi eq, %arg1, %c0_i32 : i32
    %1 = arith.extui %0 : i1 to i32
    %c0_i32_0 = arith.constant 0 : i32
    %2 = arith.cmpi ne, %1, %c0_i32_0 : i32
    scf.if %2 {
      %cst_28 = arith.constant 0.000000e+00 : bf16
      %47 = vector.broadcast %cst_28 : bf16 to vector<16x128xbf16>
      %c0_29 = arith.constant 0 : index
      %c0_30 = arith.constant 0 : index
      %48 = vector.load %arg11[%c0_29, %c0_30] : memref<16x128xbf16, #tpu.memory_space<vmem>>, vector<16x128xbf16>
      tpu.vector_store %arg11[%c0_29, %c0_30], %47 {strides = array<i32>} : memref<16x128xbf16, #tpu.memory_space<vmem>>, vector<16x128xbf16>,
    } else {
    }
    %c0 = arith.constant 0 : index
    %c0_1 = arith.constant 0 : index
    %c0_2 = arith.constant 0 : index
    %3 = vector.load %arg2[%c0, %c0_1, %c0_2] : memref<1x16x128xbf16, #tpu.memory_space<vmem>>, vector<1x16x128xbf16>
    %4 = vector.shape_cast %3 : vector<1x16x128xbf16> to vector<16x128xbf16>
    %c0_3 = arith.constant 0 : index
    %c0_4 = arith.constant 0 : index
    %5 = vector.load %arg11[%c0_3, %c0_4] : memref<16x128xbf16, #tpu.memory_space<vmem>>, vector<16x128xbf16>
    %6 = vector.extract_strided_slice %5 {offsets = [0, 124], sizes = [16, 4], strides = [1, 1]} : vector<16x128xbf16> to vector<16x4xbf16>
    %7 = vector.extract_strided_slice %4 {offsets = [0, 0], sizes = [16, 124], strides = [1, 1]} : vector<16x128xbf16> to vector<16x124xbf16>
    %8 = tpu.concatenate %6, %7 in 1 : vector<16x4xbf16>, vector<16x124xbf16> -> vector<16x128xbf16>
    %9 = tpu.concatenate %8, %4 in 0 : vector<16x128xbf16>, vector<16x128xbf16> -> vector<32x128xbf16>
    %c0_5 = arith.constant 0 : index
    %c0_6 = arith.constant 0 : index
    %10 = vector.load %arg3[%c0_5, %c0_6] : memref<32x32xbf16, #tpu.memory_space<vmem>>, vector<32x32xbf16>
    %cst = arith.constant dense<0.000000e+00> : vector<32x128xf32>
    %11 = tpu.matmul %10, %9, %cst {dimension_numbers = #tpu.dot_dimension_numbers<[1], [0], [0], [1], [0, 0, 1, 1], [], []>} : vector<32x32xbf16>, vector<32x128xbf16>, vector<32x128xf32> -> vector<32x128xf32>
    %c0_7 = arith.constant 0 : index
    %c0_8 = arith.constant 0 : index
    %12 = vector.load %arg4[%c0_7, %c0_8] : memref<32x1xf32, #tpu.memory_space<vmem>>, vector<32x1xf32>
    %13 = vector.broadcast %12 : vector<32x1xf32> to vector<32x128xf32>
    %14 = arith.addf %11, %13 : vector<32x128xf32>
    %c0_9 = arith.constant 0 : index
    %c0_10 = arith.constant 0 : index
    %15 = vector.load %arg5[%c0_9, %c0_10] : memref<32x32xbf16, #tpu.memory_space<vmem>>, vector<32x32xbf16>
    %16 = arith.truncf %14 : vector<32x128xf32> to vector<32x128xbf16>
    %cst_11 = arith.constant dense<0.000000e+00> : vector<32x128xf32>
    %17 = tpu.matmul %15, %16, %cst_11 {dimension_numbers = #tpu.dot_dimension_numbers<[1], [0], [0], [1], [0, 0, 1, 1], [], []>} : vector<32x32xbf16>, vector<32x128xbf16>, vector<32x128xf32> -> vector<32x128xf32>
    %c0_12 = arith.constant 0 : index
    %c0_13 = arith.constant 0 : index
    %18 = vector.load %arg6[%c0_12, %c0_13] : memref<32x1xf32, #tpu.memory_space<vmem>>, vector<32x1xf32>
    %19 = vector.broadcast %18 : vector<32x1xf32> to vector<32x128xf32>
    %20 = arith.addf %17, %19 : vector<32x128xf32>
    %21 = vector.extract_strided_slice %20 {offsets = [0, 0], sizes = [16, 128], strides = [1, 1]} : vector<32x128xf32> to vector<16x128xf32>
    %22 = math.tanh %21 : vector<16x128xf32>
    %23 = vector.extract_strided_slice %20 {offsets = [16, 0], sizes = [16, 128], strides = [1, 1]} : vector<32x128xf32> to vector<16x128xf32>
    %24 = arith.negf %23 : vector<16x128xf32>
    %25 = math.exp %24 : vector<16x128xf32>
    %cst_14 = arith.constant 1.000000e+00 : f32
    %26 = vector.broadcast %cst_14 : f32 to vector<16x128xf32>
    %27 = arith.addf %26, %25 : vector<16x128xf32>
    %28 = arith.divf %26, %27 : vector<16x128xf32>
    %29 = arith.mulf %22, %28 : vector<16x128xf32>
    %c0_15 = arith.constant 0 : index
    %c0_16 = arith.constant 0 : index
    %30 = vector.load %arg7[%c0_15, %c0_16] : memref<32x16xbf16, #tpu.memory_space<vmem>>, vector<32x16xbf16>
    %31 = arith.truncf %29 : vector<16x128xf32> to vector<16x128xbf16>
    %cst_17 = arith.constant dense<0.000000e+00> : vector<32x128xf32>
    %32 = tpu.matmul %30, %31, %cst_17 {dimension_numbers = #tpu.dot_dimension_numbers<[1], [0], [0], [1], [0, 0, 1, 1], [], []>} : vector<32x16xbf16>, vector<16x128xbf16>, vector<32x128xf32> -> vector<32x128xf32>
    %c0_18 = arith.constant 0 : index
    %c0_19 = arith.constant 0 : index
    %33 = vector.load %arg8[%c0_18, %c0_19] : memref<32x1xf32, #tpu.memory_space<vmem>>, vector<32x1xf32>
    %34 = vector.broadcast %33 : vector<32x1xf32> to vector<32x128xf32>
    %35 = arith.addf %32, %34 : vector<32x128xf32>
    %36 = vector.extract_strided_slice %35 {offsets = [0, 0], sizes = [16, 128], strides = [1, 1]} : vector<32x128xf32> to vector<16x128xf32>
    %c0_20 = arith.constant 0 : index
    %c0_21 = arith.constant 0 : index
    %c0_22 = arith.constant 0 : index
    %37 = vector.load %arg10[%c0_20, %c0_21, %c0_22] : memref<1x16x128xf32, #tpu.memory_space<vmem>>, vector<1x16x128xf32>
    %38 = vector.shape_cast %37 : vector<1x16x128xf32> to vector<16x128xf32>
    %39 = vector.shape_cast %36 : vector<16x128xf32> to vector<1x16x128xf32>
    tpu.vector_store %arg10[%c0_20, %c0_21, %c0_22], %39 {strides = array<i32>} : memref<1x16x128xf32, #tpu.memory_space<vmem>>, vector<1x16x128xf32>,
    %40 = vector.extract_strided_slice %35 {offsets = [16, 0], sizes = [16, 128], strides = [1, 1]} : vector<32x128xf32> to vector<16x128xf32>
    %41 = arith.extf %4 : vector<16x128xbf16> to vector<16x128xf32>
    %42 = arith.addf %40, %41 : vector<16x128xf32>
    %c0_23 = arith.constant 0 : index
    %c0_24 = arith.constant 0 : index
    %c0_25 = arith.constant 0 : index
    %43 = vector.load %arg9[%c0_23, %c0_24, %c0_25] : memref<1x16x128xf32, #tpu.memory_space<vmem>>, vector<1x16x128xf32>
    %44 = vector.shape_cast %43 : vector<1x16x128xf32> to vector<16x128xf32>
    %45 = vector.shape_cast %42 : vector<16x128xf32> to vector<1x16x128xf32>
    tpu.vector_store %arg9[%c0_23, %c0_24, %c0_25], %45 {strides = array<i32>} : memref<1x16x128xf32, #tpu.memory_space<vmem>>, vector<1x16x128xf32>,
    %c0_26 = arith.constant 0 : index
    %c0_27 = arith.constant 0 : index
    %46 = vector.load %arg11[%c0_26, %c0_27] : memref<16x128xbf16, #tpu.memory_space<vmem>>, vector<16x128xbf16>
    tpu.vector_store %arg11[%c0_26, %c0_27], %4 {strides = array<i32>} : memref<16x128xbf16, #tpu.memory_space<vmem>>, vector<16x128xbf16>,
    return
  }
  func.func @transform_0(%arg0: i32, %arg1: i32) -> (i32, i32, i32) {
    %c0_i32 = arith.constant 0 : i32
    %c0_i32_0 = arith.constant 0 : i32
    return %arg0, %c0_i32, %arg1 : i32, i32, i32
  }
  func.func @transform_1(%arg0: i32, %arg1: i32) -> (i32, i32) {
    %c0_i32 = arith.constant 0 : i32
    %c0_i32_0 = arith.constant 0 : i32
    %c0_i32_1 = arith.constant 0 : i32
    return %c0_i32, %c0_i32_0 : i32, i32
  }
  func.func @transform_2(%arg0: i32, %arg1: i32) -> (i32, i32) {
    %c0_i32 = arith.constant 0 : i32
    %c0_i32_0 = arith.constant 0 : i32
    %c0_i32_1 = arith.constant 0 : i32
    return %c0_i32, %c0_i32_0 : i32, i32
  }
  func.func @transform_3(%arg0: i32, %arg1: i32) -> (i32, i32) {
    %c0_i32 = arith.constant 0 : i32
    %c0_i32_0 = arith.constant 0 : i32
    %c0_i32_1 = arith.constant 0 : i32
    return %c0_i32, %c0_i32_0 : i32, i32
  }
  func.func @transform_4(%arg0: i32, %arg1: i32) -> (i32, i32) {
    %c0_i32 = arith.constant 0 : i32
    %c0_i32_0 = arith.constant 0 : i32
    %c0_i32_1 = arith.constant 0 : i32
    return %c0_i32, %c0_i32_0 : i32, i32
  }
  func.func @transform_5(%arg0: i32, %arg1: i32) -> (i32, i32) {
    %c0_i32 = arith.constant 0 : i32
    %c0_i32_0 = arith.constant 0 : i32
    %c0_i32_1 = arith.constant 0 : i32
    return %c0_i32, %c0_i32_0 : i32, i32
  }
  func.func @transform_6(%arg0: i32, %arg1: i32) -> (i32, i32) {
    %c0_i32 = arith.constant 0 : i32
    %c0_i32_0 = arith.constant 0 : i32
    %c0_i32_1 = arith.constant 0 : i32
    return %c0_i32, %c0_i32_0 : i32, i32
  }
  func.func @transform_7(%arg0: i32, %arg1: i32) -> (i32, i32, i32) {
    %c0_i32 = arith.constant 0 : i32
    %c0_i32_0 = arith.constant 0 : i32
    return %arg0, %c0_i32, %arg1 : i32, i32, i32
  }
  func.func @transform_8(%arg0: i32, %arg1: i32) -> (i32, i32, i32) {
    %c0_i32 = arith.constant 0 : i32
    %c0_i32_0 = arith.constant 0 : i32
    return %arg0, %c0_i32, %arg1 : i32, i32, i32
  }
}

module attributes {stable_mosaic.version = 11 : i64} {
  func.func @residual_block_kernel(%arg0: i32, %arg1: i32, %arg2: memref<1x16x128xbf16, #tpu.memory_space<vmem>>, %arg3: memref<32x32xbf16, #tpu.memory_space<vmem>>, %arg4: memref<32x1xf32, #tpu.memory_space<vmem>>, %arg5: memref<32x32xbf16, #tpu.memory_space<vmem>>, %arg6: memref<32x1xf32, #tpu.memory_space<vmem>>, %arg7: memref<32x16xbf16, #tpu.memory_space<vmem>>, %arg8: memref<32x1xf32, #tpu.memory_space<vmem>>, %arg9: memref<1x16x128xf32, #tpu.memory_space<vmem>>, %arg10: memref<1x16x128xf32, #tpu.memory_space<vmem>>, %arg11: memref<16x128xbf16, #tpu.memory_space<vmem>>) attributes {dimension_semantics = [#tpu.dimension_semantics<parallel>, #tpu.dimension_semantics<arbitrary>], iteration_bounds = array<i64: 2, 2>, scalar_prefetch = 0 : i64, scratch_operands = 1 : i64, tpu.core_type = #tpu.core_type<tc>, window_params = [{transform_indices = @transform_0, window_bounds = array<i64: 1, 16, 128>}, {pipeline_mode = #tpu.pipeline_mode<synchronous>, transform_indices = @transform_1, window_bounds = array<i64: 32, 32>}, {pipeline_mode = #tpu.pipeline_mode<synchronous>, transform_indices = @transform_2, window_bounds = array<i64: 32, 1>}, {pipeline_mode = #tpu.pipeline_mode<synchronous>, transform_indices = @transform_3, window_bounds = array<i64: 32, 32>}, {pipeline_mode = #tpu.pipeline_mode<synchronous>, transform_indices = @transform_4, window_bounds = array<i64: 32, 1>}, {pipeline_mode = #tpu.pipeline_mode<synchronous>, transform_indices = @transform_5, window_bounds = array<i64: 32, 16>}, {pipeline_mode = #tpu.pipeline_mode<synchronous>, transform_indices = @transform_6, window_bounds = array<i64: 32, 1>}, {transform_indices = @transform_7, window_bounds = array<i64: 1, 16, 128>}, {transform_indices = @transform_8, window_bounds = array<i64: 1, 16, 128>}]} {
    %c0_i32 = arith.constant 0 : i32
    %0 = arith.cmpi eq, %arg1, %c0_i32 : i32
    %1 = arith.extui %0 : i1 to i32
    %c0_i32_0 = arith.constant 0 : i32
    %2 = arith.cmpi ne, %1, %c0_i32_0 : i32
    scf.if %2 {
      %cst_28 = arith.constant 0.000000e+00 : bf16
      %47 = vector.broadcast %cst_28 : bf16 to vector<16x128xbf16>
      %c0_29 = arith.constant 0 : index
      %c0_30 = arith.constant 0 : index
      %48 = vector.load %arg11[%c0_29, %c0_30] : memref<16x128xbf16, #tpu.memory_space<vmem>>, vector<16x128xbf16>
      tpu.vector_store %arg11[%c0_29, %c0_30], %47 {strides = array<i32>} : memref<16x128xbf16, #tpu.memory_space<vmem>>, vector<16x128xbf16>,
    } else {
    }
    %c0 = arith.constant 0 : index
    %c0_1 = arith.constant 0 : index
    %c0_2 = arith.constant 0 : index
    %3 = vector.load %arg2[%c0, %c0_1, %c0_2] : memref<1x16x128xbf16, #tpu.memory_space<vmem>>, vector<1x16x128xbf16>
    %4 = vector.shape_cast %3 : vector<1x16x128xbf16> to vector<16x128xbf16>
    %c0_3 = arith.constant 0 : index
    %c0_4 = arith.constant 0 : index
    %5 = vector.load %arg11[%c0_3, %c0_4] : memref<16x128xbf16, #tpu.memory_space<vmem>>, vector<16x128xbf16>
    %6 = vector.extract_strided_slice %5 {offsets = [0, 124], sizes = [16, 4], strides = [1, 1]} : vector<16x128xbf16> to vector<16x4xbf16>
    %7 = vector.extract_strided_slice %4 {offsets = [0, 0], sizes = [16, 124], strides = [1, 1]} : vector<16x128xbf16> to vector<16x124xbf16>
    %8 = tpu.concatenate %6, %7 in 1 : vector<16x4xbf16>, vector<16x124xbf16> -> vector<16x128xbf16>
    %9 = tpu.concatenate %8, %4 in 0 : vector<16x128xbf16>, vector<16x128xbf16> -> vector<32x128xbf16>
    %c0_5 = arith.constant 0 : index
    %c0_6 = arith.constant 0 : index
    %10 = vector.load %arg3[%c0_5, %c0_6] : memref<32x32xbf16, #tpu.memory_space<vmem>>, vector<32x32xbf16>
    %cst = arith.constant dense<0.000000e+00> : vector<32x128xf32>
    %11 = tpu.matmul %10, %9, %cst {dimension_numbers = #tpu.dot_dimension_numbers<[1], [0], [0], [1], [0, 0, 1, 1], [], []>} : vector<32x32xbf16>, vector<32x128xbf16>, vector<32x128xf32> -> vector<32x128xf32>
    %c0_7 = arith.constant 0 : index
    %c0_8 = arith.constant 0 : index
    %12 = vector.load %arg4[%c0_7, %c0_8] : memref<32x1xf32, #tpu.memory_space<vmem>>, vector<32x1xf32>
    %13 = vector.broadcast %12 : vector<32x1xf32> to vector<32x128xf32>
    %14 = arith.addf %11, %13 : vector<32x128xf32>
    %c0_9 = arith.constant 0 : index
    %c0_10 = arith.constant 0 : index
    %15 = vector.load %arg5[%c0_9, %c0_10] : memref<32x32xbf16, #tpu.memory_space<vmem>>, vector<32x32xbf16>
    %16 = arith.truncf %14 : vector<32x128xf32> to vector<32x128xbf16>
    %cst_11 = arith.constant dense<0.000000e+00> : vector<32x128xf32>
    %17 = tpu.matmul %15, %16, %cst_11 {dimension_numbers = #tpu.dot_dimension_numbers<[1], [0], [0], [1], [0, 0, 1, 1], [], []>} : vector<32x32xbf16>, vector<32x128xbf16>, vector<32x128xf32> -> vector<32x128xf32>
    %c0_12 = arith.constant 0 : index
    %c0_13 = arith.constant 0 : index
    %18 = vector.load %arg6[%c0_12, %c0_13] : memref<32x1xf32, #tpu.memory_space<vmem>>, vector<32x1xf32>
    %19 = vector.broadcast %18 : vector<32x1xf32> to vector<32x128xf32>
    %20 = arith.addf %17, %19 : vector<32x128xf32>
    %21 = vector.extract_strided_slice %20 {offsets = [0, 0], sizes = [16, 128], strides = [1, 1]} : vector<32x128xf32> to vector<16x128xf32>
    %22 = math.tanh %21 : vector<16x128xf32>
    %23 = vector.extract_strided_slice %20 {offsets = [16, 0], sizes = [16, 128], strides = [1, 1]} : vector<32x128xf32> to vector<16x128xf32>
    %24 = arith.negf %23 : vector<16x128xf32>
    %25 = math.exp %24 : vector<16x128xf32>
    %cst_14 = arith.constant 1.000000e+00 : f32
    %26 = vector.broadcast %cst_14 : f32 to vector<16x128xf32>
    %27 = arith.addf %26, %25 : vector<16x128xf32>
    %28 = arith.divf %26, %27 : vector<16x128xf32>
    %29 = arith.mulf %22, %28 : vector<16x128xf32>
    %c0_15 = arith.constant 0 : index
    %c0_16 = arith.constant 0 : index
    %30 = vector.load %arg7[%c0_15, %c0_16] : memref<32x16xbf16, #tpu.memory_space<vmem>>, vector<32x16xbf16>
    %31 = arith.truncf %29 : vector<16x128xf32> to vector<16x128xbf16>
    %cst_17 = arith.constant dense<0.000000e+00> : vector<32x128xf32>
    %32 = tpu.matmul %30, %31, %cst_17 {dimension_numbers = #tpu.dot_dimension_numbers<[1], [0], [0], [1], [0, 0, 1, 1], [], []>} : vector<32x16xbf16>, vector<16x128xbf16>, vector<32x128xf32> -> vector<32x128xf32>
    %c0_18 = arith.constant 0 : index
    %c0_19 = arith.constant 0 : index
    %33 = vector.load %arg8[%c0_18, %c0_19] : memref<32x1xf32, #tpu.memory_space<vmem>>, vector<32x1xf32>
    %34 = vector.broadcast %33 : vector<32x1xf32> to vector<32x128xf32>
    %35 = arith.addf %32, %34 : vector<32x128xf32>
    %36 = vector.extract_strided_slice %35 {offsets = [0, 0], sizes = [16, 128], strides = [1, 1]} : vector<32x128xf32> to vector<16x128xf32>
    %c0_20 = arith.constant 0 : index
    %c0_21 = arith.constant 0 : index
    %c0_22 = arith.constant 0 : index
    %37 = vector.load %arg10[%c0_20, %c0_21, %c0_22] : memref<1x16x128xf32, #tpu.memory_space<vmem>>, vector<1x16x128xf32>
    %38 = vector.shape_cast %37 : vector<1x16x128xf32> to vector<16x128xf32>
    %39 = vector.shape_cast %36 : vector<16x128xf32> to vector<1x16x128xf32>
    tpu.vector_store %arg10[%c0_20, %c0_21, %c0_22], %39 {strides = array<i32>} : memref<1x16x128xf32, #tpu.memory_space<vmem>>, vector<1x16x128xf32>,
    %40 = vector.extract_strided_slice %35 {offsets = [16, 0], sizes = [16, 128], strides = [1, 1]} : vector<32x128xf32> to vector<16x128xf32>
    %41 = arith.extf %4 : vector<16x128xbf16> to vector<16x128xf32>
    %42 = arith.addf %40, %41 : vector<16x128xf32>
    %c0_23 = arith.constant 0 : index
    %c0_24 = arith.constant 0 : index
    %c0_25 = arith.constant 0 : index
    %43 = vector.load %arg9[%c0_23, %c0_24, %c0_25] : memref<1x16x128xf32, #tpu.memory_space<vmem>>, vector<1x16x128xf32>
    %44 = vector.shape_cast %43 : vector<1x16x128xf32> to vector<16x128xf32>
    %45 = vector.shape_cast %42 : vector<16x128xf32> to vector<1x16x128xf32>
    tpu.vector_store %arg9[%c0_23, %c0_24, %c0_25], %45 {strides = array<i32>} : memref<1x16x128xf32, #tpu.memory_space<vmem>>, vector<1x16x128xf32>,
    %c0_26 = arith.constant 0 : index
    %c0_27 = arith.constant 0 : index
    %46 = vector.load %arg11[%c0_26, %c0_27] : memref<16x128xbf16, #tpu.memory_space<vmem>>, vector<16x128xbf16>
    tpu.vector_store %arg11[%c0_26, %c0_27], %4 {strides = array<i32>} : memref<16x128xbf16, #tpu.memory_space<vmem>>, vector<16x128xbf16>,
    return
  }
  func.func @transform_0(%arg0: i32, %arg1: i32) -> (i32, i32, i32) {
    %c0_i32 = arith.constant 0 : i32
    %c0_i32_0 = arith.constant 0 : i32
    return %arg0, %c0_i32, %arg1 : i32, i32, i32
  }
  func.func @transform_1(%arg0: i32, %arg1: i32) -> (i32, i32) {
    %c0_i32 = arith.constant 0 : i32
    %c0_i32_0 = arith.constant 0 : i32
    %c0_i32_1 = arith.constant 0 : i32
    return %c0_i32, %c0_i32_0 : i32, i32
  }
  func.func @transform_2(%arg0: i32, %arg1: i32) -> (i32, i32) {
    %c0_i32 = arith.constant 0 : i32
    %c0_i32_0 = arith.constant 0 : i32
    %c0_i32_1 = arith.constant 0 : i32
    return %c0_i32, %c0_i32_0 : i32, i32
  }
  func.func @transform_3(%arg0: i32, %arg1: i32) -> (i32, i32) {
    %c0_i32 = arith.constant 0 : i32
    %c0_i32_0 = arith.constant 0 : i32
    %c0_i32_1 = arith.constant 0 : i32
    return %c0_i32, %c0_i32_0 : i32, i32
  }
  func.func @transform_4(%arg0: i32, %arg1: i32) -> (i32, i32) {
    %c0_i32 = arith.constant 0 : i32
    %c0_i32_0 = arith.constant 0 : i32
    %c0_i32_1 = arith.constant 0 : i32
    return %c0_i32, %c0_i32_0 : i32, i32
  }
  func.func @transform_5(%arg0: i32, %arg1: i32) -> (i32, i32) {
    %c0_i32 = arith.constant 0 : i32
    %c0_i32_0 = arith.constant 0 : i32
    %c0_i32_1 = arith.constant 0 : i32
    return %c0_i32, %c0_i32_0 : i32, i32
  }
  func.func @transform_6(%arg0: i32, %arg1: i32) -> (i32, i32) {
    %c0_i32 = arith.constant 0 : i32
    %c0_i32_0 = arith.constant 0 : i32
    %c0_i32_1 = arith.constant 0 : i32
    return %c0_i32, %c0_i32_0 : i32, i32
  }
  func.func @transform_7(%arg0: i32, %arg1: i32) -> (i32, i32, i32) {
    %c0_i32 = arith.constant 0 : i32
    %c0_i32_0 = arith.constant 0 : i32
    return %arg0, %c0_i32, %arg1 : i32, i32, i32
  }
  func.func @transform_8(%arg0: i32, %arg1: i32) -> (i32, i32, i32) {
    %c0_i32 = arith.constant 0 : i32
    %c0_i32_0 = arith.constant 0 : i32
    return %arg0, %c0_i32, %arg1 : i32, i32, i32
  }
}

</mosaic_0001>

<llo_original>
// kernel: tpu_custom_call.1
$region0: #{tpu_custom_call.1}
  #allocation0 [shape = 'u32[]', space=smem, size = 0x4, offset = 0x4, fixed_abs, tag = 'smem constant byte address 0x4 - core index']
  #allocation1 [shape = 'u32[144,128]{1,0:T(1,128)}', space=vmem, size = 0x12000, scoped, tag = 'internal scratch']
  #allocation2 [shape = 'bf16[16,128]{1,0:T(8,128)(2,1)}', space=vmem, size = 0x1000, scoped, tag = 'scratch operand']
  %s0 = inlined_call_operand.vmem [shape: bf16[2,16,256], index: 0, kind: input, shape index: {}]
  %s1 = inlined_call_operand.vmem [shape: bf16[32,32], index: 1, kind: input, shape index: {}]
  %s2 = inlined_call_operand.vmem [shape: f32[32,1], index: 2, kind: input, shape index: {}]
  %s3 = inlined_call_operand.vmem [shape: bf16[32,32], index: 3, kind: input, shape index: {}]
  %s4 = inlined_call_operand.vmem [shape: f32[32,1], index: 4, kind: input, shape index: {}]
  %s5 = inlined_call_operand.vmem [shape: bf16[32,16], index: 5, kind: input, shape index: {}]
  %s6 = inlined_call_operand.vmem [shape: f32[32,1], index: 6, kind: input, shape index: {}]
  %s7 = inlined_call_operand.hbm [shape: f32[2,16,256], index: 7, kind: output, shape index: {0}]
  %s8 = inlined_call_operand.hbm [shape: f32[2,16,256], index: 8, kind: output, shape index: {1}]
  %9 = xla_tuple %s7, %s8
  %s10 = sld [smem:[#allocation0]]
  $region114: #{tpu_custom_call.1} parent=0
    _
  %s12 = ssub.s32 1, %s10
  %s13 = scalar_select 0, %s12, %s10
  $region1: #{tpu_custom_call.1} parent=0
    #allocation3 [shape = 'u8[8192]{0}', space=vmem, size = 0x2000, scoped, tag = 'input window, operand 0']
    #allocation4 [shape = 'u8[16384]{0}', space=vmem, size = 0x4000, scoped, tag = 'output window, operand 0']
    #allocation5 [shape = 's32[2]{0}', space=sflag, size = 0x8, scoped, tag = 'scoped memory for tpu_custom_call.1']
    #allocation6 [shape = 'u8[16384]{0}', space=vmem, size = 0x4000, scoped, tag = 'output window, operand 1']
    #allocation7 [shape = 's32[2]{0}', space=sflag, size = 0x8, scoped, tag = 'scoped memory for tpu_custom_call.1']
    %14 = vsyncpa [#allocation5], 0
    %s15 = scalar_lea.sflag [#allocation5], 1
    %16 = vsyncpa %s15, 0
    %17 = vsyncpa [#allocation7], 0
    %s18 = scalar_lea.sflag [#allocation7], 1
    %19 = vsyncpa %s18, 0
    loop: start=0, step=1, limit=6
    $region2: #{tpu_custom_call.1} parent=1 // loop_pre_header
      _
    $region3: #{tpu_custom_call.1} parent=1 // loop_header
      %s21 = sphi 0, %s25
      %p22 = scmp.ge.s32.totalorder %s21, 6
      %s28 = sphi 0, %s40
      %s29 = sphi 0, %s36
      %s30 = sphi 0, %s28
      %s31 = sphi 0, %s29
      %s32 = sphi 0, %s30
      %s33 = sphi 0, %s31
      %s45 = sphi 0, %s47
      %s48 = sphi 0, %s45
      %s49 = sphi 0, %s48
      %s65 = sphi 0, %s49
      %s69 = sphi 0, %s69
      %s71 = sphi 0, %s69
      %s72 = sphi 0, %s71
      %s86 = sphi 0, %s72
      %s90 = sphi 0, %s90
      %s92 = sphi 0, %s90
      %s93 = sphi 0, %s92
      %s107 = sphi 0, %s93
      %s111 = sphi 0, %s111
      %s113 = sphi 0, %s111
      %s114 = sphi 0, %s113
      %s128 = sphi 0, %s114
      %s132 = sphi 0, %s132
      %s134 = sphi 0, %s132
      %s135 = sphi 0, %s134
      %s149 = sphi 0, %s135
      %s153 = sphi 0, %s153
      %s155 = sphi 0, %s153
      %s156 = sphi 0, %s155
      %s170 = sphi 0, %s156
      %s174 = sphi 0, %s174
      %s176 = sphi 0, %s174
      %s177 = sphi 0, %s176
      %s191 = sphi 0, %s177
      %s199 = sphi 0, %s201
      %s202 = sphi 0, %s199
      %s203 = sphi 0, %s202
      %s219 = sphi 0, %s203
      %s227 = sphi 0, %s229
      %s230 = sphi 0, %s227
      %s231 = sphi 0, %s230
      %s247 = sphi 0, %s231
    $region4: #{tpu_custom_call.1} parent=1 // loop_header_branch
      %24 = sbr.rel (%p22) target = $region8
    $region5: #{tpu_custom_call.1} parent=1 // loop_body
      %s26 = ssub.s32 %s21, 1
      %s27 = ssub.s32 %s21, 2
      %s34 = sadd.s32 1, %s29
      %p35 = scmp.ge.s32.totalorder %s34, 2
      %s36 = scalar_select %p35, 0, %s34
      %s37 = sadd.s32 1, %s28
      %s38 = scalar_select %p35, %s37, %s28
      %p39 = scmp.ge.s32.totalorder %s38, 2
      %s40 = scalar_select %p39, 0, %s38
      %s41 = ssub.s32 %s28, %s40
      %s42 = ssub.s32 %s29, %s36
      %s43 = sor.u32 %s41, %s42
      %p44 = scmp.eq.s32.totalorder %s43, 0
      %s46 = sadd.s32 %s45, 1
      %s47 = scalar_select %p44, %s45, %s46
      %p50 = pneg %p44
      %p51 = scmp.eq.s32.totalorder %s21, 3
      %p52 = por %p50, %p51
      %p53 = scmp.ne.s32.totalorder %s45, %s48
      %p54 = scmp.eq.s32.totalorder %s21, 0
      %p55 = por %p53, %p54
      %p56 = scmp.ne.s32.totalorder %s45, %s48
      %p57 = scmp.eq.s32.totalorder %s26, 3
      %p58 = por %p56, %p57
      %p59 = scmp.ne.s32.totalorder %s48, %s49
      %p60 = scmp.eq.s32.totalorder %s26, 0
      %p61 = por %p59, %p60
      %p62 = scmp.ne.s32.totalorder %s48, %s49
      %p63 = scmp.eq.s32.totalorder %s27, 3
      %p64 = por %p62, %p63
      %p66 = scmp.ne.s32.totalorder %s49, %s65
      %p67 = scmp.eq.s32.totalorder %s27, 0
      %p68 = por %p66, %p67
      %s70 = sadd.s32 %s69, 1
      %p73 = scmp.eq.s32.totalorder %s21, 3
      %p74 = scmp.ne.s32.totalorder %s69, %s71
      %p75 = scmp.eq.s32.totalorder %s21, 0
      %p76 = por %p74, %p75
      %p77 = scmp.ne.s32.totalorder %s69, %s71
      %p78 = scmp.eq.s32.totalorder %s26, 3
      %p79 = por %p77, %p78
      %p80 = scmp.ne.s32.totalorder %s71, %s72
      %p81 = scmp.eq.s32.totalorder %s26, 0
      %p82 = por %p80, %p81
      %p83 = scmp.ne.s32.totalorder %s71, %s72
      %p84 = scmp.eq.s32.totalorder %s27, 3
      %p85 = por %p83, %p84
      %p87 = scmp.ne.s32.totalorder %s72, %s86
      %p88 = scmp.eq.s32.totalorder %s27, 0
      %p89 = por %p87, %p88
      %s91 = sadd.s32 %s90, 1
      %p94 = scmp.eq.s32.totalorder %s21, 3
      %p95 = scmp.ne.s32.totalorder %s90, %s92
      %p96 = scmp.eq.s32.totalorder %s21, 0
      %p97 = por %p95, %p96
      %p98 = scmp.ne.s32.totalorder %s90, %s92
      %p99 = scmp.eq.s32.totalorder %s26, 3
      %p100 = por %p98, %p99
      %p101 = scmp.ne.s32.totalorder %s92, %s93
      %p102 = scmp.eq.s32.totalorder %s26, 0
      %p103 = por %p101, %p102
      %p104 = scmp.ne.s32.totalorder %s92, %s93
      %p105 = scmp.eq.s32.totalorder %s27, 3
      %p106 = por %p104, %p105
      %p108 = scmp.ne.s32.totalorder %s93, %s107
      %p109 = scmp.eq.s32.totalorder %s27, 0
      %p110 = por %p108, %p109
      %s112 = sadd.s32 %s111, 1
      %p115 = scmp.eq.s32.totalorder %s21, 3
      %p116 = scmp.ne.s32.totalorder %s111, %s113
      %p117 = scmp.eq.s32.totalorder %s21, 0
      %p118 = por %p116, %p117
      %p119 = scmp.ne.s32.totalorder %s111, %s113
      %p120 = scmp.eq.s32.totalorder %s26, 3
      %p121 = por %p119, %p120
      %p122 = scmp.ne.s32.totalorder %s113, %s114
      %p123 = scmp.eq.s32.totalorder %s26, 0
      %p124 = por %p122, %p123
      %p125 = scmp.ne.s32.totalorder %s113, %s114
      %p126 = scmp.eq.s32.totalorder %s27, 3
      %p127 = por %p125, %p126
      %p129 = scmp.ne.s32.totalorder %s114, %s128
      %p130 = scmp.eq.s32.totalorder %s27, 0
      %p131 = por %p129, %p130
      %s133 = sadd.s32 %s132, 1
      %p136 = scmp.eq.s32.totalorder %s21, 3
      %p137 = scmp.ne.s32.totalorder %s132, %s134
      %p138 = scmp.eq.s32.totalorder %s21, 0
      %p139 = por %p137, %p138
      %p140 = scmp.ne.s32.totalorder %s132, %s134
      %p141 = scmp.eq.s32.totalorder %s26, 3
      %p142 = por %p140, %p141
      %p143 = scmp.ne.s32.totalorder %s134, %s135
      %p144 = scmp.eq.s32.totalorder %s26, 0
      %p145 = por %p143, %p144
      %p146 = scmp.ne.s32.totalorder %s134, %s135
      %p147 = scmp.eq.s32.totalorder %s27, 3
      %p148 = por %p146, %p147
      %p150 = scmp.ne.s32.totalorder %s135, %s149
      %p151 = scmp.eq.s32.totalorder %s27, 0
      %p152 = por %p150, %p151
      %s154 = sadd.s32 %s153, 1
      %p157 = scmp.eq.s32.totalorder %s21, 3
      %p158 = scmp.ne.s32.totalorder %s153, %s155
      %p159 = scmp.eq.s32.totalorder %s21, 0
      %p160 = por %p158, %p159
      %p161 = scmp.ne.s32.totalorder %s153, %s155
      %p162 = scmp.eq.s32.totalorder %s26, 3
      %p163 = por %p161, %p162
      %p164 = scmp.ne.s32.totalorder %s155, %s156
      %p165 = scmp.eq.s32.totalorder %s26, 0
      %p166 = por %p164, %p165
      %p167 = scmp.ne.s32.totalorder %s155, %s156
      %p168 = scmp.eq.s32.totalorder %s27, 3
      %p169 = por %p167, %p168
      %p171 = scmp.ne.s32.totalorder %s156, %s170
      %p172 = scmp.eq.s32.totalorder %s27, 0
      %p173 = por %p171, %p172
      %s175 = sadd.s32 %s174, 1
      %p178 = scmp.eq.s32.totalorder %s21, 3
      %p179 = scmp.ne.s32.totalorder %s174, %s176
      %p180 = scmp.eq.s32.totalorder %s21, 0
      %p181 = por %p179, %p180
      %p182 = scmp.ne.s32.totalorder %s174, %s176
      %p183 = scmp.eq.s32.totalorder %s26, 3
      %p184 = por %p182, %p183
      %p185 = scmp.ne.s32.totalorder %s176, %s177
      %p186 = scmp.eq.s32.totalorder %s26, 0
      %p187 = por %p185, %p186
      %p188 = scmp.ne.s32.totalorder %s176, %s177
      %p189 = scmp.eq.s32.totalorder %s27, 3
      %p190 = por %p188, %p189
      %p192 = scmp.ne.s32.totalorder %s177, %s191
      %p193 = scmp.eq.s32.totalorder %s27, 0
      %p194 = por %p192, %p193
      %s195 = ssub.s32 %s28, %s40
      %s196 = ssub.s32 %s29, %s36
      %s197 = sor.u32 %s195, %s196
      %p198 = scmp.eq.s32.totalorder %s197, 0
      %s200 = sadd.s32 %s199, 1
      %s201 = scalar_select %p198, %s199, %s200
      %p204 = pneg %p198
      %p205 = scmp.eq.s32.totalorder %s21, 3
      %p206 = por %p204, %p205
      %p207 = scmp.ne.s32.totalorder %s199, %s202
      %p208 = scmp.eq.s32.totalorder %s21, 0
      %p209 = por %p207, %p208
      %p210 = scmp.ne.s32.totalorder %s199, %s202
      %p211 = scmp.eq.s32.totalorder %s26, 3
      %p212 = por %p210, %p211
      %p213 = scmp.ne.s32.totalorder %s202, %s203
      %p214 = scmp.eq.s32.totalorder %s26, 0
      %p215 = por %p213, %p214
      %p216 = scmp.ne.s32.totalorder %s202, %s203
      %p217 = scmp.eq.s32.totalorder %s27, 3
      %p218 = por %p216, %p217
      %p220 = scmp.ne.s32.totalorder %s203, %s219
      %p221 = scmp.eq.s32.totalorder %s27, 0
      %p222 = por %p220, %p221
      %s223 = ssub.s32 %s28, %s40
      %s224 = ssub.s32 %s29, %s36
      %s225 = sor.u32 %s223, %s224
      %p226 = scmp.eq.s32.totalorder %s225, 0
      %s228 = sadd.s32 %s227, 1
      %s229 = scalar_select %p226, %s227, %s228
      %p232 = pneg %p226
      %p233 = scmp.eq.s32.totalorder %s21, 3
      %p234 = por %p232, %p233
      %p235 = scmp.ne.s32.totalorder %s227, %s230
      %p236 = scmp.eq.s32.totalorder %s21, 0
      %p237 = por %p235, %p236
      %p238 = scmp.ne.s32.totalorder %s227, %s230
      %p239 = scmp.eq.s32.totalorder %s26, 3
      %p240 = por %p238, %p239
      %p241 = scmp.ne.s32.totalorder %s230, %s231
      %p242 = scmp.eq.s32.totalorder %s26, 0
      %p243 = por %p241, %p242
      %p244 = scmp.ne.s32.totalorder %s230, %s231
      %p245 = scmp.eq.s32.totalorder %s27, 3
      %p246 = por %p244, %p245
      %p248 = scmp.ne.s32.totalorder %s231, %s247
      %p249 = scmp.eq.s32.totalorder %s27, 0
      %p250 = por %p248, %p249
      %p251 = scmp.le.s32.totalorder 1, %s21
      %p252 = scmp.lt.s32.totalorder %s21, 5
      %p253 = pnand %p251, %p252
      %p254 = pneg %p253
      // Predicated region
      $region9: #{tpu_custom_call.1} parent=5 // pred_check
        _
      $region10: #{tpu_custom_call.1} parent=5 // pred_check_branch
        %256 = sbr.rel (%p253) target = $region12
      $region11: #{tpu_custom_call.1} parent=5 // pred_region
        %s257 = ssub.s32 %s21, 1
        // Predicated region
        $region13: #{tpu_custom_call.1} parent=11 // pred_check
          %p258 = pneg %p82
        $region14: #{tpu_custom_call.1} parent=11 // pred_check_branch
          %260 = sbr.rel (%p258) target = $region16
        $region15: #{tpu_custom_call.1} parent=11 // pred_region
          _
        $region16: #{tpu_custom_call.1} parent=11 // pred_fallthru
          _
        // Predicated region
        $region17: #{tpu_custom_call.1} parent=11 // pred_check
          %p261 = pneg %p103
        $region18: #{tpu_custom_call.1} parent=11 // pred_check_branch
          %263 = sbr.rel (%p261) target = $region20
        $region19: #{tpu_custom_call.1} parent=11 // pred_region
          _
        $region20: #{tpu_custom_call.1} parent=11 // pred_fallthru
          _
        // Predicated region
        $region21: #{tpu_custom_call.1} parent=11 // pred_check
          %p264 = pneg %p124
        $region22: #{tpu_custom_call.1} parent=11 // pred_check_branch
          %266 = sbr.rel (%p264) target = $region24
        $region23: #{tpu_custom_call.1} parent=11 // pred_region
          _
        $region24: #{tpu_custom_call.1} parent=11 // pred_fallthru
          _
        // Predicated region
        $region25: #{tpu_custom_call.1} parent=11 // pred_check
          %p267 = pneg %p145
        $region26: #{tpu_custom_call.1} parent=11 // pred_check_branch
          %269 = sbr.rel (%p267) target = $region28
        $region27: #{tpu_custom_call.1} parent=11 // pred_region
          _
        $region28: #{tpu_custom_call.1} parent=11 // pred_fallthru
          _
        // Predicated region
        $region29: #{tpu_custom_call.1} parent=11 // pred_check
          %p270 = pneg %p166
        $region30: #{tpu_custom_call.1} parent=11 // pred_check_branch
          %272 = sbr.rel (%p270) target = $region32
        $region31: #{tpu_custom_call.1} parent=11 // pred_region
          _
        $region32: #{tpu_custom_call.1} parent=11 // pred_fallthru
          _
        // Predicated region
        $region33: #{tpu_custom_call.1} parent=11 // pred_check
          %p273 = pneg %p187
        $region34: #{tpu_custom_call.1} parent=11 // pred_check_branch
          %275 = sbr.rel (%p273) target = $region36
        $region35: #{tpu_custom_call.1} parent=11 // pred_region
          _
        $region36: #{tpu_custom_call.1} parent=11 // pred_fallthru
          _
      $region12: #{tpu_custom_call.1} parent=5 // pred_fallthru
        _
      %p276 = scmp.lt.s32.totalorder %s21, 4
      // Predicated region
      $region37: #{tpu_custom_call.1} parent=5 // pred_check
        %p277 = pneg %p276
      $region38: #{tpu_custom_call.1} parent=5 // pred_check_branch
        %279 = sbr.rel (%p277) target = $region40
      $region39: #{tpu_custom_call.1} parent=5 // pred_region
        // Predicated region
        $region41: #{tpu_custom_call.1} parent=39 // pred_check
          %p280 = pneg %p55
        $region42: #{tpu_custom_call.1} parent=39 // pred_check_branch
          %282 = sbr.rel (%p280) target = $region44
        $region43: #{tpu_custom_call.1} parent=39 // pred_region
          %s283 = sand.u32 %s45, 1
          %s284 = sand.u32 %s45, 1
          %s285 = smul.addr %s284, 8
          %s286 = scalar_lea.vmem [#allocation3], %s285
          %s287 = smul.addr %s28, 4
          %s288 = sadd.s32 %s29, %s287
          %s289 = smul.addr %s288, 4
          %s290 = scalar_lea.vmem %s0, %s289
          // Predicated region
          $region45: #{tpu_custom_call.1} parent=43 // pred_check
            _
          $region46: #{tpu_custom_call.1} parent=43 // pred_check_branch
            %292 = sbr.rel (0) target = $region48
          $region47: #{tpu_custom_call.1} parent=43 // pred_region
            // Predicated region
            $region49: #{tpu_custom_call.1} parent=47 // pred_check
              _
            $region50: #{tpu_custom_call.1} parent=47 // pred_check_branch
              %294 = sbr.rel target = $region52
            $region51: #{tpu_custom_call.1} parent=47 // pred_region
              // Predicated region
              $region64: #{tpu_custom_call.1} parent=51 // pred_check
                _
              $region65: #{tpu_custom_call.1} parent=51 // pred_check_branch
                %312 = sbr.rel (0) target = $region67
              $region66: #{tpu_custom_call.1} parent=51 // pred_region
                loop: start=0, step=1, limit=1
                $region68: #{tpu_custom_call.1} parent=66 // loop_pre_header
                  _
                $region69: #{tpu_custom_call.1} parent=66 // loop_header
                  %s314 = sphi 0, %s318
                  %p315 = scmp.ge.s32.totalorder %s314, 1
                  %s319 = sphi %s290, %s290
                  %s320 = sphi %s286, %s286
                $region70: #{tpu_custom_call.1} parent=66 // loop_header_branch
                  %317 = sbr.rel (%p315) target = $region74
                $region71: #{tpu_custom_call.1} parent=66 // loop_body
                  _
                $region72: #{tpu_custom_call.1} parent=66 // loop_footer
                  %s318 = sadd.s32 1, %s314
                $region73: #{tpu_custom_call.1} parent=66 // loop_footer_branch
                  %313 = sbr.rel target = $region69
                $region74: #{tpu_custom_call.1} parent=66 // loop_exit
                  _
                %s322 = ssub.s32 16, 1
                loop: start=0, step=1, limit=1
                $region75: #{tpu_custom_call.1} parent=66 // loop_pre_header
                  _
                $region76: #{tpu_custom_call.1} parent=66 // loop_header
                  %s324 = sphi 0, %s328
                  %p325 = scmp.ge.s32.totalorder %s324, 1
                  %s329 = sphi %s290, %s290
                  %s330 = sphi %s286, %s286
                $region77: #{tpu_custom_call.1} parent=66 // loop_header_branch
                  %327 = sbr.rel (%p325) target = $region81
                $region78: #{tpu_custom_call.1} parent=66 // loop_body
                  %v331 = vld [vmem:[%s329] sm:%s322]
                  %332 = vst [vmem:[%s330] sm:%s322] %v331
                  %v333 = vld [vmem:[%s329 + $0x8] sm:%s322]
                  %334 = vst [vmem:[%s330 + $0x4] sm:%s322] %v333
                $region79: #{tpu_custom_call.1} parent=66 // loop_footer
                  %s328 = sadd.s32 1, %s324
                $region80: #{tpu_custom_call.1} parent=66 // loop_footer_branch
                  %323 = sbr.rel target = $region76
                $region81: #{tpu_custom_call.1} parent=66 // loop_exit
                  _
              $region67: #{tpu_custom_call.1} parent=51 // pred_fallthru
                _
            $region52: #{tpu_custom_call.1} parent=47 // pred_fallthru
              _
            // Predicated region
            $region53: #{tpu_custom_call.1} parent=47 // pred_check
              _
            $region54: #{tpu_custom_call.1} parent=47 // pred_check_branch
              %296 = sbr.rel (0) target = $region56
            $region55: #{tpu_custom_call.1} parent=47 // pred_region
              %s298 = ssub.s32 16, 1
              loop: start=0, step=1, limit=1
              $region57: #{tpu_custom_call.1} parent=55 // loop_pre_header
                _
              $region58: #{tpu_custom_call.1} parent=55 // loop_header
                %s300 = sphi 0, %s304
                %p301 = scmp.ge.s32.totalorder %s300, 1
                %s305 = sphi %s290, %s290
                %s306 = sphi %s286, %s286
              $region59: #{tpu_custom_call.1} parent=55 // loop_header_branch
                %303 = sbr.rel (%p301) target = $region63
              $region60: #{tpu_custom_call.1} parent=55 // loop_body
                %v307 = vld [vmem:[%s305] sm:%s298]
                %308 = vst [vmem:[%s306] sm:%s298] %v307
                %v309 = vld [vmem:[%s305 + $0x8] sm:%s298]
                %310 = vst [vmem:[%s306 + $0x4] sm:%s298] %v309
              $region61: #{tpu_custom_call.1} parent=55 // loop_footer
                %s304 = sadd.s32 1, %s300
              $region62: #{tpu_custom_call.1} parent=55 // loop_footer_branch
                %299 = sbr.rel target = $region58
              $region63: #{tpu_custom_call.1} parent=55 // loop_exit
                _
            $region56: #{tpu_custom_call.1} parent=47 // pred_fallthru
              _
          $region48: #{tpu_custom_call.1} parent=43 // pred_fallthru
            _
          %335 = vnop
        $region44: #{tpu_custom_call.1} parent=39 // pred_fallthru
          _
      $region40: #{tpu_custom_call.1} parent=5 // pred_fallthru
        _
      %p336 = scmp.le.s32.totalorder 1, %s21
      %p337 = scmp.lt.s32.totalorder %s21, 5
      %p338 = pnand %p336, %p337
      %p339 = pneg %p338
      // Predicated region
      $region82: #{tpu_custom_call.1} parent=5 // pred_check
        _
      $region83: #{tpu_custom_call.1} parent=5 // pred_check_branch
        %341 = sbr.rel (%p338) target = $region85
      $region84: #{tpu_custom_call.1} parent=5 // pred_region
        %s342 = ssub.s32 %s21, 1
        %s343 = sand.u32 %s48, 1
        %s344 = sand.u32 %s48, 1
        %s345 = smul.addr %s344, 8
        %s346 = scalar_lea.vmem [#allocation3], %s345
        // Predicated region
        $region86: #{tpu_custom_call.1} parent=84 // pred_check
          %p347 = pneg %p61
        $region87: #{tpu_custom_call.1} parent=84 // pred_check_branch
          %349 = sbr.rel (%p347) target = $region89
        $region88: #{tpu_custom_call.1} parent=84 // pred_region
          _
        $region89: #{tpu_custom_call.1} parent=84 // pred_fallthru
          _
        %s350 = sand.u32 %s48, 1
        %s351 = sand.u32 %s48, 1
        %s352 = smul.addr %s351, 8
        %s353 = scalar_lea.vmem [#allocation3], %s352
        %p354 = pneg %p61
        %p355 = pneg %p58
        %p356 = pneg %p82
        %p357 = pneg %p79
        %p358 = pneg %p103
        %p359 = pneg %p100
        %p360 = pneg %p124
        %p361 = pneg %p121
        %p362 = pneg %p145
        %p363 = pneg %p142
        %p364 = pneg %p166
        %p365 = pneg %p163
        %p366 = pneg %p187
        %p367 = pneg %p184
        %p368 = pneg %p215
        %p369 = pneg %p212
        %s370 = sand.u32 %s202, 1
        %s371 = scalar_lea.sflag [#allocation5], %s370
        %s372 = sand.u32 %s202, 1
        %s373 = smul.addr %s372, 16
        %s374 = scalar_lea.vmem [#allocation4], %s373
        %p375 = pneg %p243
        %p376 = pneg %p240
        %s377 = sand.u32 %s230, 1
        %s378 = scalar_lea.sflag [#allocation7], %s377
        %s379 = sand.u32 %s230, 1
        %s380 = smul.addr %s379, 16
        %s381 = scalar_lea.vmem [#allocation6], %s380
        %p383 = scmp.eq.s32.totalorder %s31, 0
        // Predicated region
        $region90: #{tpu_custom_call.1} parent=84 // pred_check
          %p384 = pneg %p383
        $region91: #{tpu_custom_call.1} parent=84 // pred_check_branch
          %386 = sbr.rel (%p384) target = $region93
        $region92: #{tpu_custom_call.1} parent=84 // pred_region
          %387 = vst [vmem:[#allocation2] sm:$0xf] 0
          %388 = vst [vmem:[#allocation2 + $0x4] sm:$0xf] 0
        $region93: #{tpu_custom_call.1} parent=84 // pred_fallthru
          _
        %v389 = vld [vmem:[%s346] sm:$0xf]
        %v390 = vld [vmem:[%s346 + $0x4] sm:$0xf]
        %v391 = vld [vmem:[#allocation2] sm:$0xf]
        %v392 = vld [vmem:[#allocation2 + $0x4] sm:$0xf]
        %v395 = vunpack.c.l.b16 %v391
        %v396 = vunpack.c.l.b16 %v392
        %v397 = vpack.c.b16 %v396, %v395
        %398 = vrot.lane.b32.xlu0 %v397, 4
        %v399 = vpop.permute.xlu0 %398
        %v402 = vunpack.c.l.b16 %v389
        %v403 = vunpack.c.l.b16 %v390
        %v404 = vpack.c.b16 %v403, %v402
        %405 = vrot.lane.b32.xlu0 %v404, 4
        %v406 = vpop.permute.xlu0 %405
        %vm407 = vcmask 31744
        %v410 = vsel %vm407, %v399, %v406
        %v413 = vld [vmem:[%s1] sm:$0xf]
        %v414 = vld [vmem:[%s1 + $0x4] sm:$0xf]
        %v415 = vld [vmem:[%s1 + $0x8] sm:$0xf]
        %v416 = vld [vmem:[%s1 + $0xc] sm:$0xf]
        %v417 = vld [vmem:[%s2] sm:$0xff]
        %v418 = vld [vmem:[%s2 + $0x8] sm:$0xff]
        %v419 = vld [vmem:[%s2 + $0x10] sm:$0xff]
        %v420 = vld [vmem:[%s2 + $0x18] sm:$0xff]
        %422 = vset.pattern.permute.xlu0 0
        %423 = vperm.xlu0 %422, %v417
        %v424 = vpop.permute.xlu0 %423
        %427 = vset.pattern.permute.xlu0 0
        %428 = vperm.xlu0 %427, %v418
        %v429 = vpop.permute.xlu0 %428
        %432 = vset.pattern.permute.xlu0 0
        %433 = vperm.xlu0 %432, %v419
        %v434 = vpop.permute.xlu0 %433
        %437 = vset.pattern.permute.xlu0 0
        %438 = vperm.xlu0 %437, %v420
        %v439 = vpop.permute.xlu0 %438
        %v445 = vunpack.c.l.b16 %v413
        %v446 = vunpack.c.l.b16 %v414
        %v447 = vunpack.c.l.b16 %v415
        %v448 = vunpack.c.l.b16 %v416
        %v449 = vpack.c.b16 %v446, %v445
        %v450 = vpack.c.b16 %v448, %v447
        %vm451 = vcmask 261120
        %v453 = vsel %vm451, %v449, 0
        %v456 = vsel %vm451, %v450, 0
        %458 = vmatprep.subr.bf16.mxu0 0
        %459 = vmatpush1.bf16.msra.mxu0 0
        %460 = vmatprep.subr.bf16.mxu0 0
        %461 = vmatpush1.bf16.msra.mxu0 0
        %462 = vmatprep.subr.bf16.mxu0 0
        %463 = vmatpush1.bf16.msra.mxu0 0
        %464 = vmatprep.subr.bf16.mxu0 0
        %465 = vmatpush1.bf16.msra.mxu0 0
        %466 = vmatprep.subr.bf16.mxu0 0
        %467 = vmatpush1.bf16.msra.mxu0 0
        %468 = vmatprep.subr.bf16.mxu0 0
        %469 = vmatpush1.bf16.msra.mxu0 0
        %470 = vmatprep.subr.bf16.mxu0 0
        %471 = vmatpush1.bf16.msra.mxu0 %v404
        %472 = vmatprep.subr.bf16.mxu0 0
        %473 = vmatpush1.bf16.msra.mxu0 %v410
        %474 = vmatprep.subr.bf16.mxu0 0
        %475 = vmatpush2.bf16.msra.mxu0 0
        %476 = vmatprep.subr.bf16.mxu0 0
        %477 = vmatpush2.bf16.msra.mxu0 0
        %478 = vmatprep.subr.bf16.mxu0 0
        %479 = vmatpush2.bf16.msra.mxu0 0
        %480 = vmatprep.subr.bf16.mxu0 0
        %481 = vmatpush2.bf16.msra.mxu0 0
        %482 = vmatprep.subr.bf16.mxu0 0
        %483 = vmatpush2.bf16.msra.mxu0 0
        %484 = vmatprep.subr.bf16.mxu0 0
        %485 = vmatpush2.bf16.msra.mxu0 0
        %486 = vmatprep.subr.bf16.mxu0 0
        %487 = vmatpush2.bf16.msra.mxu0 0
        %488 = vmatprep.subr.bf16.mxu0 0
        %489 = vmatpush2.bf16.msra.mxu0 0
        %490 = vmatprep.mubr.bf16.mxu0 0
        %491 = vmatmul.mubr.bf16.gmra.mxu0 %v453
        %v492 = vpop.f32.mrf.mxu0
        %v493 = vadd.f32 %v424, %v492
        %v494 = vpop.f32.mrf.mxu0
        %v495 = vpop.f32.mrf.mxu0
        %v496 = vadd.f32 %v429, %v495
        %v497 = vpop.f32.mrf.mxu0
        %498 = vmatprep.mubr.bf16.mxu0 0
        %499 = vmatmul.mubr.bf16.gmra.mxu0 %v456
        %v500 = vpop.f32.mrf.mxu0
        %v501 = vadd.f32 %v434, %v500
        %v502 = vpop.f32.mrf.mxu0
        %v503 = vpop.f32.mrf.mxu0
        %v504 = vadd.f32 %v439, %v503
        %v505 = vpop.f32.mrf.mxu0
        %506 = vdwg.mxu0
        %v507 = vld [vmem:[%s3] sm:$0xf]
        %v508 = vld [vmem:[%s3 + $0x4] sm:$0xf]
        %v509 = vld [vmem:[%s3 + $0x8] sm:$0xf]
        %v510 = vld [vmem:[%s3 + $0xc] sm:$0xf]
        %v511 = vpack.c.bf16 %v496, %v493
        %v512 = vpack.c.bf16 %v504, %v501
        %v513 = vld [vmem:[%s4] sm:$0xff]
        %v514 = vld [vmem:[%s4 + $0x8] sm:$0xff]
        %v515 = vld [vmem:[%s4 + $0x10] sm:$0xff]
        %v516 = vld [vmem:[%s4 + $0x18] sm:$0xff]
        %518 = vset.pattern.permute.xlu0 0
        %519 = vperm.xlu0 %518, %v513
        %v520 = vpop.permute.xlu0 %519
        %523 = vset.pattern.permute.xlu0 0
        %524 = vperm.xlu0 %523, %v514
        %v525 = vpop.permute.xlu0 %524
        %528 = vset.pattern.permute.xlu0 0
        %529 = vperm.xlu0 %528, %v515
        %v530 = vpop.permute.xlu0 %529
        %533 = vset.pattern.permute.xlu0 0
        %534 = vperm.xlu0 %533, %v516
        %v535 = vpop.permute.xlu0 %534
        %v541 = vunpack.c.l.b16 %v507
        %v542 = vunpack.c.l.b16 %v508
        %v543 = vunpack.c.l.b16 %v509
        %v544 = vunpack.c.l.b16 %v510
        %v545 = vpack.c.b16 %v542, %v541
        %v546 = vpack.c.b16 %v544, %v543
        %v548 = vsel %vm451, %v545, 0
        %v551 = vsel %vm451, %v546, 0
        %553 = vmatprep.subr.bf16.mxu0 0
        %554 = vmatpush1.bf16.msra.mxu0 0
        %555 = vmatprep.subr.bf16.mxu0 0
        %556 = vmatpush1.bf16.msra.mxu0 0
        %557 = vmatprep.subr.bf16.mxu0 0
        %558 = vmatpush1.bf16.msra.mxu0 0
        %559 = vmatprep.subr.bf16.mxu0 0
        %560 = vmatpush1.bf16.msra.mxu0 0
        %561 = vmatprep.subr.bf16.mxu0 0
        %562 = vmatpush1.bf16.msra.mxu0 0
        %563 = vmatprep.subr.bf16.mxu0 0
        %564 = vmatpush1.bf16.msra.mxu0 0
        %565 = vmatprep.subr.bf16.mxu0 0
        %566 = vmatpush1.bf16.msra.mxu0 %v512
        %567 = vmatprep.subr.bf16.mxu0 0
        %568 = vmatpush1.bf16.msra.mxu0 %v511
        %569 = vmatprep.subr.bf16.mxu0 0
        %570 = vmatpush2.bf16.msra.mxu0 0
        %571 = vmatprep.subr.bf16.mxu0 0
        %572 = vmatpush2.bf16.msra.mxu0 0
        %573 = vmatprep.subr.bf16.mxu0 0
        %574 = vmatpush2.bf16.msra.mxu0 0
        %575 = vmatprep.subr.bf16.mxu0 0
        %576 = vmatpush2.bf16.msra.mxu0 0
        %577 = vmatprep.subr.bf16.mxu0 0
        %578 = vmatpush2.bf16.msra.mxu0 0
        %579 = vmatprep.subr.bf16.mxu0 0
        %580 = vmatpush2.bf16.msra.mxu0 0
        %581 = vmatprep.subr.bf16.mxu0 0
        %582 = vmatpush2.bf16.msra.mxu0 0
        %583 = vmatprep.subr.bf16.mxu0 0
        %584 = vmatpush2.bf16.msra.mxu0 0
        %585 = vmatprep.mubr.bf16.mxu0 0
        %586 = vmatmul.mubr.bf16.gmra.mxu0 %v548
        %v587 = vpop.f32.mrf.mxu0
        %v588 = vadd.f32 %v520, %v587
        %v589 = vpop.f32.mrf.mxu0
        %v590 = vpop.f32.mrf.mxu0
        %v591 = vadd.f32 %v525, %v590
        %v592 = vpop.f32.mrf.mxu0
        %593 = vmatprep.mubr.bf16.mxu0 0
        %594 = vmatmul.mubr.bf16.gmra.mxu0 %v551
        %v595 = vpop.f32.mrf.mxu0
        %v596 = vadd.f32 %v530, %v595
        %v597 = vpop.f32.mrf.mxu0
        %v598 = vpop.f32.mrf.mxu0
        %v599 = vadd.f32 %v535, %v598
        %v600 = vpop.f32.mrf.mxu0
        %601 = vdwg.mxu0
        %v602 = vtanh.pop %v588
        %v603 = vtanh.pop %v591
        %v604 = vxor.u32 %v596, 2147483648
        %v605 = vxor.u32 %v599, 2147483648
        %v606 = vmul.f32 %v604, 1.442695
        %v607 = vpow.pop %v606
        %v608 = vmul.f32 %v605, 1.442695
        %v609 = vpow.pop %v608
        %v610 = vadd.f32 %v607, 1.0
        %v611 = vadd.f32 %v609, 1.0
        %v612 = vrcp.pop %v610
        %v613 = vmul.f32 1.0, %v612
        %v614 = vrcp.pop %v611
        %v615 = vmul.f32 1.0, %v614
        %v616 = vmul.f32 %v602, %v613
        %v617 = vmul.f32 %v603, %v615
        %v618 = vld [vmem:[%s5] sm:$0xf]
        %v619 = vld [vmem:[%s5 + $0x4] sm:$0xf]
        %v620 = vld [vmem:[%s5 + $0x8] sm:$0xf]
        %v621 = vld [vmem:[%s5 + $0xc] sm:$0xf]
        %v622 = vpack.c.bf16 %v617, %v616
        %v623 = vld [vmem:[%s6] sm:$0xff]
        %v624 = vld [vmem:[%s6 + $0x8] sm:$0xff]
        %v625 = vld [vmem:[%s6 + $0x10] sm:$0xff]
        %v626 = vld [vmem:[%s6 + $0x18] sm:$0xff]
        %628 = vset.pattern.permute.xlu0 0
        %629 = vperm.xlu0 %628, %v623
        %v630 = vpop.permute.xlu0 %629
        %633 = vset.pattern.permute.xlu0 0
        %634 = vperm.xlu0 %633, %v624
        %v635 = vpop.permute.xlu0 %634
        %638 = vset.pattern.permute.xlu0 0
        %639 = vperm.xlu0 %638, %v625
        %v640 = vpop.permute.xlu0 %639
        %643 = vset.pattern.permute.xlu0 0
        %644 = vperm.xlu0 %643, %v626
        %v645 = vpop.permute.xlu0 %644
        %v651 = vunpack.c.l.b16 %v618
        %v652 = vunpack.c.l.b16 %v619
        %v653 = vunpack.c.l.b16 %v620
        %v654 = vunpack.c.l.b16 %v621
        %v655 = vpack.c.b16 %v652, %v651
        %v656 = vpack.c.b16 %v654, %v653
        %vm657 = vcmask 130048
        %v659 = vsel %vm657, %v655, 0
        %v662 = vsel %vm657, %v656, 0
        %664 = vmatprep.subr.bf16.mxu0 0
        %665 = vmatpush1.bf16.msra.mxu0 0
        %666 = vmatprep.subr.bf16.mxu0 0
        %667 = vmatpush1.bf16.msra.mxu0 0
        %668 = vmatprep.subr.bf16.mxu0 0
        %669 = vmatpush1.bf16.msra.mxu0 0
        %670 = vmatprep.subr.bf16.mxu0 0
        %671 = vmatpush1.bf16.msra.mxu0 0
        %672 = vmatprep.subr.bf16.mxu0 0
        %673 = vmatpush1.bf16.msra.mxu0 0
        %674 = vmatprep.subr.bf16.mxu0 0
        %675 = vmatpush1.bf16.msra.mxu0 0
        %676 = vmatprep.subr.bf16.mxu0 0
        %677 = vmatpush1.bf16.msra.mxu0 0
        %678 = vmatprep.subr.bf16.mxu0 0
        %679 = vmatpush1.bf16.msra.mxu0 %v622
        %680 = vmatprep.subr.bf16.mxu0 0
        %681 = vmatpush2.bf16.msra.mxu0 0
        %682 = vmatprep.subr.bf16.mxu0 0
        %683 = vmatpush2.bf16.msra.mxu0 0
        %684 = vmatprep.subr.bf16.mxu0 0
        %685 = vmatpush2.bf16.msra.mxu0 0
        %686 = vmatprep.subr.bf16.mxu0 0
        %687 = vmatpush2.bf16.msra.mxu0 0
        %688 = vmatprep.subr.bf16.mxu0 0
        %689 = vmatpush2.bf16.msra.mxu0 0
        %690 = vmatprep.subr.bf16.mxu0 0
        %691 = vmatpush2.bf16.msra.mxu0 0
        %692 = vmatprep.subr.bf16.mxu0 0
        %693 = vmatpush2.bf16.msra.mxu0 0
        %694 = vmatprep.subr.bf16.mxu0 0
        %695 = vmatpush2.bf16.msra.mxu0 0
        %696 = vmatprep.mubr.bf16.mxu0 0
        %697 = vmatmul.mubr.bf16.gmra.mxu0 %v659
        %v698 = vpop.f32.mrf.mxu0
        %v699 = vadd.f32 %v630, %v698
        %v700 = vpop.f32.mrf.mxu0
        %v701 = vpop.f32.mrf.mxu0
        %v702 = vadd.f32 %v635, %v701
        %v703 = vpop.f32.mrf.mxu0
        %704 = vmatprep.mubr.bf16.mxu0 0
        %705 = vmatmul.mubr.bf16.gmra.mxu0 %v662
        %v706 = vpop.f32.mrf.mxu0
        %v707 = vadd.f32 %v640, %v706
        %v708 = vpop.f32.mrf.mxu0
        %v709 = vpop.f32.mrf.mxu0
        %v710 = vadd.f32 %v645, %v709
        %v711 = vpop.f32.mrf.mxu0
        %712 = vdwg.mxu0
        %713 = vst [vmem:[%s381] sm:$0xff] %v699
        %714 = vst [vmem:[%s381 + $0x8] sm:$0xff] %v702
        %v715 = vunpack.c.l.bf16 %v389
        %v716 = vunpack.c.l.bf16 %v390
        %v717 = vadd.f32 %v707, %v715
        %v718 = vadd.f32 %v710, %v716
        %719 = vst [vmem:[%s374] sm:$0xff] %v717
        %720 = vst [vmem:[%s374 + $0x8] sm:$0xff] %v718
        %721 = vst [vmem:[#allocation2] sm:$0xf] %v389
        %722 = vst [vmem:[#allocation2 + $0x4] sm:$0xf] %v390
        %s723 = sand.u32 %s202, 1
        %s724 = scalar_lea.sflag [#allocation5], %s723
        %s725 = sand.u32 %s202, 1
        %s726 = smul.addr %s725, 16
        %s727 = scalar_lea.vmem [#allocation4], %s726
        %s728 = sand.u32 %s230, 1
        %s729 = scalar_lea.sflag [#allocation7], %s728
        %s730 = sand.u32 %s230, 1
        %s731 = smul.addr %s730, 16
        %s732 = scalar_lea.vmem [#allocation6], %s731
        // Predicated region
        $region94: #{tpu_custom_call.1} parent=84 // pred_check
          %p733 = pneg %p212
        $region95: #{tpu_custom_call.1} parent=84 // pred_check_branch
          %735 = sbr.rel (%p733) target = $region97
        $region96: #{tpu_custom_call.1} parent=84 // pred_region
          %s737 = ssub.s32 256, 256
          %738 = vsyncadd %s724, %s737
          %s739 = smul.addr %s30, 4
          %s740 = sadd.s32 %s31, %s739
          %s741 = smul.addr %s740, 128
          %s742 = scalar_lea.hbm %s7, %s741
          %s743 = sshll.u32 %s727, 4
          %s744 = int_to_ptr.vmem [resolvable:$true] %s743
          %749 = dma.vmem_to_hbm [thread:$0]  %s744, 256, %s742, %s724, 128, 256, 8
        $region97: #{tpu_custom_call.1} parent=84 // pred_fallthru
          _
        // Predicated region
        $region98: #{tpu_custom_call.1} parent=84 // pred_check
          %p750 = pneg %p240
        $region99: #{tpu_custom_call.1} parent=84 // pred_check_branch
          %752 = sbr.rel (%p750) target = $region101
        $region100: #{tpu_custom_call.1} parent=84 // pred_region
          %s754 = ssub.s32 256, 256
          %755 = vsyncadd %s729, %s754
          %s756 = smul.addr %s30, 4
          %s757 = sadd.s32 %s31, %s756
          %s758 = smul.addr %s757, 128
          %s759 = scalar_lea.hbm %s8, %s758
          %s760 = sshll.u32 %s732, 4
          %s761 = int_to_ptr.vmem [resolvable:$true] %s760
          %766 = dma.vmem_to_hbm [thread:$0]  %s761, 256, %s759, %s729, 128, 256, 8
        $region101: #{tpu_custom_call.1} parent=84 // pred_fallthru
          _
      $region85: #{tpu_custom_call.1} parent=5 // pred_fallthru
        _
      %p767 = scmp.le.s32.totalorder 2, %s21
      // Predicated region
      $region102: #{tpu_custom_call.1} parent=5 // pred_check
        %p768 = pneg %p767
      $region103: #{tpu_custom_call.1} parent=5 // pred_check_branch
        %770 = sbr.rel (%p768) target = $region105
      $region104: #{tpu_custom_call.1} parent=5 // pred_region
        %s771 = ssub.s32 %s21, 2
        // Predicated region
        $region106: #{tpu_custom_call.1} parent=104 // pred_check
          %p772 = pneg %p218
        $region107: #{tpu_custom_call.1} parent=104 // pred_check_branch
          %774 = sbr.rel (%p772) target = $region109
        $region108: #{tpu_custom_call.1} parent=104 // pred_region
          %s775 = sand.u32 %s203, 1
          %s776 = scalar_lea.sflag [#allocation5], %s775
          %s777 = sand.u32 %s203, 1
          %s778 = smul.addr %s777, 16
          %s779 = scalar_lea.vmem [#allocation4], %s778
          %780 = dma.done %s776, 256
        $region109: #{tpu_custom_call.1} parent=104 // pred_fallthru
          _
        // Predicated region
        $region110: #{tpu_custom_call.1} parent=104 // pred_check
          %p781 = pneg %p246
        $region111: #{tpu_custom_call.1} parent=104 // pred_check_branch
          %783 = sbr.rel (%p781) target = $region113
        $region112: #{tpu_custom_call.1} parent=104 // pred_region
          %s784 = sand.u32 %s231, 1
          %s785 = scalar_lea.sflag [#allocation7], %s784
          %s786 = sand.u32 %s231, 1
          %s787 = smul.addr %s786, 16
          %s788 = scalar_lea.vmem [#allocation6], %s787
          %789 = dma.done %s785, 256
        $region113: #{tpu_custom_call.1} parent=104 // pred_fallthru
          _
      $region105: #{tpu_custom_call.1} parent=5 // pred_fallthru
        _
    $region6: #{tpu_custom_call.1} parent=1 // loop_footer
      %s25 = sadd.s32 1, %s21
    $region7: #{tpu_custom_call.1} parent=1 // loop_footer_branch
      %20 = sbr.rel target = $region3
    $region8: #{tpu_custom_call.1} parent=1 // loop_exit
      _
    %790 = vsyncpa [#allocation5], 1
    %s791 = scalar_lea.sflag [#allocation5], 1
    %792 = vsyncpa %s791, 1
    %793 = vsyncpa [#allocation7], 1
    %s794 = scalar_lea.sflag [#allocation7], 1
    %795 = vsyncpa %s794, 1

// kernel: tpu_custom_call.1
$region0: #{tpu_custom_call.1}
  #allocation0 [shape = 'u32[]', space=smem, size = 0x4, offset = 0x4, fixed_abs, tag = 'smem constant byte address 0x4 - core index']
  #allocation1 [shape = 'u32[144,128]{1,0:T(1,128)}', space=vmem, size = 0x12000, scoped, tag = 'internal scratch']
  #allocation2 [shape = 'bf16[16,128]{1,0:T(8,128)(2,1)}', space=vmem, size = 0x1000, scoped, tag = 'scratch operand']
  %s0 = inlined_call_operand.vmem [shape: bf16[2,16,256], index: 0, kind: input, shape index: {}]
  %s1 = inlined_call_operand.vmem [shape: bf16[32,32], index: 1, kind: input, shape index: {}]
  %s2 = inlined_call_operand.vmem [shape: f32[32,1], index: 2, kind: input, shape index: {}]
  %s3 = inlined_call_operand.vmem [shape: bf16[32,32], index: 3, kind: input, shape index: {}]
  %s4 = inlined_call_operand.vmem [shape: f32[32,1], index: 4, kind: input, shape index: {}]
  %s5 = inlined_call_operand.vmem [shape: bf16[32,16], index: 5, kind: input, shape index: {}]
  %s6 = inlined_call_operand.vmem [shape: f32[32,1], index: 6, kind: input, shape index: {}]
  %s7 = inlined_call_operand.hbm [shape: f32[2,16,256], index: 7, kind: output, shape index: {0}]
  %s8 = inlined_call_operand.hbm [shape: f32[2,16,256], index: 8, kind: output, shape index: {1}]
  %9 = xla_tuple %s7, %s8
  %s10 = sld [smem:[#allocation0]]
  $region114: #{tpu_custom_call.1} parent=0
    _
  %s12 = ssub.s32 1, %s10
  %s13 = scalar_select 0, %s12, %s10
  $region1: #{tpu_custom_call.1} parent=0
    #allocation3 [shape = 'u8[8192]{0}', space=vmem, size = 0x2000, scoped, tag = 'input window, operand 0']
    #allocation4 [shape = 'u8[16384]{0}', space=vmem, size = 0x4000, scoped, tag = 'output window, operand 0']
    #allocation5 [shape = 's32[2]{0}', space=sflag, size = 0x8, scoped, tag = 'scoped memory for tpu_custom_call.1']
    #allocation6 [shape = 'u8[16384]{0}', space=vmem, size = 0x4000, scoped, tag = 'output window, operand 1']
    #allocation7 [shape = 's32[2]{0}', space=sflag, size = 0x8, scoped, tag = 'scoped memory for tpu_custom_call.1']
    %14 = vsyncpa [#allocation5], 0
    %s15 = scalar_lea.sflag [#allocation5], 1
    %16 = vsyncpa %s15, 0
    %17 = vsyncpa [#allocation7], 0
    %s18 = scalar_lea.sflag [#allocation7], 1
    %19 = vsyncpa %s18, 0
    loop: start=0, step=1, limit=6
    $region2: #{tpu_custom_call.1} parent=1 // loop_pre_header
      _
    $region3: #{tpu_custom_call.1} parent=1 // loop_header
      %s21 = sphi 0, %s25
      %p22 = scmp.ge.s32.totalorder %s21, 6
      %s28 = sphi 0, %s40
      %s29 = sphi 0, %s36
      %s30 = sphi 0, %s28
      %s31 = sphi 0, %s29
      %s32 = sphi 0, %s30
      %s33 = sphi 0, %s31
      %s45 = sphi 0, %s47
      %s48 = sphi 0, %s45
      %s49 = sphi 0, %s48
      %s65 = sphi 0, %s49
      %s69 = sphi 0, %s69
      %s71 = sphi 0, %s69
      %s72 = sphi 0, %s71
      %s86 = sphi 0, %s72
      %s90 = sphi 0, %s90
      %s92 = sphi 0, %s90
      %s93 = sphi 0, %s92
      %s107 = sphi 0, %s93
      %s111 = sphi 0, %s111
      %s113 = sphi 0, %s111
      %s114 = sphi 0, %s113
      %s128 = sphi 0, %s114
      %s132 = sphi 0, %s132
      %s134 = sphi 0, %s132
      %s135 = sphi 0, %s134
      %s149 = sphi 0, %s135
      %s153 = sphi 0, %s153
      %s155 = sphi 0, %s153
      %s156 = sphi 0, %s155
      %s170 = sphi 0, %s156
      %s174 = sphi 0, %s174
      %s176 = sphi 0, %s174
      %s177 = sphi 0, %s176
      %s191 = sphi 0, %s177
      %s199 = sphi 0, %s201
      %s202 = sphi 0, %s199
      %s203 = sphi 0, %s202
      %s219 = sphi 0, %s203
      %s227 = sphi 0, %s229
      %s230 = sphi 0, %s227
      %s231 = sphi 0, %s230
      %s247 = sphi 0, %s231
    $region4: #{tpu_custom_call.1} parent=1 // loop_header_branch
      %24 = sbr.rel (%p22) target = $region8
    $region5: #{tpu_custom_call.1} parent=1 // loop_body
      %s26 = ssub.s32 %s21, 1
      %s27 = ssub.s32 %s21, 2
      %s34 = sadd.s32 1, %s29
      %p35 = scmp.ge.s32.totalorder %s34, 2
      %s36 = scalar_select %p35, 0, %s34
      %s37 = sadd.s32 1, %s28
      %s38 = scalar_select %p35, %s37, %s28
      %p39 = scmp.ge.s32.totalorder %s38, 2
      %s40 = scalar_select %p39, 0, %s38
      %s41 = ssub.s32 %s28, %s40
      %s42 = ssub.s32 %s29, %s36
      %s43 = sor.u32 %s41, %s42
      %p44 = scmp.eq.s32.totalorder %s43, 0
      %s46 = sadd.s32 %s45, 1
      %s47 = scalar_select %p44, %s45, %s46
      %p50 = pneg %p44
      %p51 = scmp.eq.s32.totalorder %s21, 3
      %p52 = por %p50, %p51
      %p53 = scmp.ne.s32.totalorder %s45, %s48
      %p54 = scmp.eq.s32.totalorder %s21, 0
      %p55 = por %p53, %p54
      %p56 = scmp.ne.s32.totalorder %s45, %s48
      %p57 = scmp.eq.s32.totalorder %s26, 3
      %p58 = por %p56, %p57
      %p59 = scmp.ne.s32.totalorder %s48, %s49
      %p60 = scmp.eq.s32.totalorder %s26, 0
      %p61 = por %p59, %p60
      %p62 = scmp.ne.s32.totalorder %s48, %s49
      %p63 = scmp.eq.s32.totalorder %s27, 3
      %p64 = por %p62, %p63
      %p66 = scmp.ne.s32.totalorder %s49, %s65
      %p67 = scmp.eq.s32.totalorder %s27, 0
      %p68 = por %p66, %p67
      %s70 = sadd.s32 %s69, 1
      %p73 = scmp.eq.s32.totalorder %s21, 3
      %p74 = scmp.ne.s32.totalorder %s69, %s71
      %p75 = scmp.eq.s32.totalorder %s21, 0
      %p76 = por %p74, %p75
      %p77 = scmp.ne.s32.totalorder %s69, %s71
      %p78 = scmp.eq.s32.totalorder %s26, 3
      %p79 = por %p77, %p78
      %p80 = scmp.ne.s32.totalorder %s71, %s72
      %p81 = scmp.eq.s32.totalorder %s26, 0
      %p82 = por %p80, %p81
      %p83 = scmp.ne.s32.totalorder %s71, %s72
      %p84 = scmp.eq.s32.totalorder %s27, 3
      %p85 = por %p83, %p84
      %p87 = scmp.ne.s32.totalorder %s72, %s86
      %p88 = scmp.eq.s32.totalorder %s27, 0
      %p89 = por %p87, %p88
      %s91 = sadd.s32 %s90, 1
      %p94 = scmp.eq.s32.totalorder %s21, 3
      %p95 = scmp.ne.s32.totalorder %s90, %s92
      %p96 = scmp.eq.s32.totalorder %s21, 0
      %p97 = por %p95, %p96
      %p98 = scmp.ne.s32.totalorder %s90, %s92
      %p99 = scmp.eq.s32.totalorder %s26, 3
      %p100 = por %p98, %p99
      %p101 = scmp.ne.s32.totalorder %s92, %s93
      %p102 = scmp.eq.s32.totalorder %s26, 0
      %p103 = por %p101, %p102
      %p104 = scmp.ne.s32.totalorder %s92, %s93
      %p105 = scmp.eq.s32.totalorder %s27, 3
      %p106 = por %p104, %p105
      %p108 = scmp.ne.s32.totalorder %s93, %s107
      %p109 = scmp.eq.s32.totalorder %s27, 0
      %p110 = por %p108, %p109
      %s112 = sadd.s32 %s111, 1
      %p115 = scmp.eq.s32.totalorder %s21, 3
      %p116 = scmp.ne.s32.totalorder %s111, %s113
      %p117 = scmp.eq.s32.totalorder %s21, 0
      %p118 = por %p116, %p117
      %p119 = scmp.ne.s32.totalorder %s111, %s113
      %p120 = scmp.eq.s32.totalorder %s26, 3
      %p121 = por %p119, %p120
      %p122 = scmp.ne.s32.totalorder %s113, %s114
      %p123 = scmp.eq.s32.totalorder %s26, 0
      %p124 = por %p122, %p123
      %p125 = scmp.ne.s32.totalorder %s113, %s114
      %p126 = scmp.eq.s32.totalorder %s27, 3
      %p127 = por %p125, %p126
      %p129 = scmp.ne.s32.totalorder %s114, %s128
      %p130 = scmp.eq.s32.totalorder %s27, 0
      %p131 = por %p129, %p130
      %s133 = sadd.s32 %s132, 1
      %p136 = scmp.eq.s32.totalorder %s21, 3
      %p137 = scmp.ne.s32.totalorder %s132, %s134
      %p138 = scmp.eq.s32.totalorder %s21, 0
      %p139 = por %p137, %p138
      %p140 = scmp.ne.s32.totalorder %s132, %s134
      %p141 = scmp.eq.s32.totalorder %s26, 3
      %p142 = por %p140, %p141
      %p143 = scmp.ne.s32.totalorder %s134, %s135
      %p144 = scmp.eq.s32.totalorder %s26, 0
      %p145 = por %p143, %p144
      %p146 = scmp.ne.s32.totalorder %s134, %s135
      %p147 = scmp.eq.s32.totalorder %s27, 3
      %p148 = por %p146, %p147
      %p150 = scmp.ne.s32.totalorder %s135, %s149
      %p151 = scmp.eq.s32.totalorder %s27, 0
      %p152 = por %p150, %p151
      %s154 = sadd.s32 %s153, 1
      %p157 = scmp.eq.s32.totalorder %s21, 3
      %p158 = scmp.ne.s32.totalorder %s153, %s155
      %p159 = scmp.eq.s32.totalorder %s21, 0
      %p160 = por %p158, %p159
      %p161 = scmp.ne.s32.totalorder %s153, %s155
      %p162 = scmp.eq.s32.totalorder %s26, 3
      %p163 = por %p161, %p162
      %p164 = scmp.ne.s32.totalorder %s155, %s156
      %p165 = scmp.eq.s32.totalorder %s26, 0
      %p166 = por %p164, %p165
      %p167 = scmp.ne.s32.totalorder %s155, %s156
      %p168 = scmp.eq.s32.totalorder %s27, 3
      %p169 = por %p167, %p168
      %p171 = scmp.ne.s32.totalorder %s156, %s170
      %p172 = scmp.eq.s32.totalorder %s27, 0
      %p173 = por %p171, %p172
      %s175 = sadd.s32 %s174, 1
      %p178 = scmp.eq.s32.totalorder %s21, 3
      %p179 = scmp.ne.s32.totalorder %s174, %s176
      %p180 = scmp.eq.s32.totalorder %s21, 0
      %p181 = por %p179, %p180
      %p182 = scmp.ne.s32.totalorder %s174, %s176
      %p183 = scmp.eq.s32.totalorder %s26, 3
      %p184 = por %p182, %p183
      %p185 = scmp.ne.s32.totalorder %s176, %s177
      %p186 = scmp.eq.s32.totalorder %s26, 0
      %p187 = por %p185, %p186
      %p188 = scmp.ne.s32.totalorder %s176, %s177
      %p189 = scmp.eq.s32.totalorder %s27, 3
      %p190 = por %p188, %p189
      %p192 = scmp.ne.s32.totalorder %s177, %s191
      %p193 = scmp.eq.s32.totalorder %s27, 0
      %p194 = por %p192, %p193
      %s195 = ssub.s32 %s28, %s40
      %s196 = ssub.s32 %s29, %s36
      %s197 = sor.u32 %s195, %s196
      %p198 = scmp.eq.s32.totalorder %s197, 0
      %s200 = sadd.s32 %s199, 1
      %s201 = scalar_select %p198, %s199, %s200
      %p204 = pneg %p198
      %p205 = scmp.eq.s32.totalorder %s21, 3
      %p206 = por %p204, %p205
      %p207 = scmp.ne.s32.totalorder %s199, %s202
      %p208 = scmp.eq.s32.totalorder %s21, 0
      %p209 = por %p207, %p208
      %p210 = scmp.ne.s32.totalorder %s199, %s202
      %p211 = scmp.eq.s32.totalorder %s26, 3
      %p212 = por %p210, %p211
      %p213 = scmp.ne.s32.totalorder %s202, %s203
      %p214 = scmp.eq.s32.totalorder %s26, 0
      %p215 = por %p213, %p214
      %p216 = scmp.ne.s32.totalorder %s202, %s203
      %p217 = scmp.eq.s32.totalorder %s27, 3
      %p218 = por %p216, %p217
      %p220 = scmp.ne.s32.totalorder %s203, %s219
      %p221 = scmp.eq.s32.totalorder %s27, 0
      %p222 = por %p220, %p221
      %s223 = ssub.s32 %s28, %s40
      %s224 = ssub.s32 %s29, %s36
      %s225 = sor.u32 %s223, %s224
      %p226 = scmp.eq.s32.totalorder %s225, 0
      %s228 = sadd.s32 %s227, 1
      %s229 = scalar_select %p226, %s227, %s228
      %p232 = pneg %p226
      %p233 = scmp.eq.s32.totalorder %s21, 3
      %p234 = por %p232, %p233
      %p235 = scmp.ne.s32.totalorder %s227, %s230
      %p236 = scmp.eq.s32.totalorder %s21, 0
      %p237 = por %p235, %p236
      %p238 = scmp.ne.s32.totalorder %s227, %s230
      %p239 = scmp.eq.s32.totalorder %s26, 3
      %p240 = por %p238, %p239
      %p241 = scmp.ne.s32.totalorder %s230, %s231
      %p242 = scmp.eq.s32.totalorder %s26, 0
      %p243 = por %p241, %p242
      %p244 = scmp.ne.s32.totalorder %s230, %s231
      %p245 = scmp.eq.s32.totalorder %s27, 3
      %p246 = por %p244, %p245
      %p248 = scmp.ne.s32.totalorder %s231, %s247
      %p249 = scmp.eq.s32.totalorder %s27, 0
      %p250 = por %p248, %p249
      %p251 = scmp.le.s32.totalorder 1, %s21
      %p252 = scmp.lt.s32.totalorder %s21, 5
      %p253 = pnand %p251, %p252
      %p254 = pneg %p253
      // Predicated region
      $region9: #{tpu_custom_call.1} parent=5 // pred_check
        _
      $region10: #{tpu_custom_call.1} parent=5 // pred_check_branch
        %256 = sbr.rel (%p253) target = $region12
      $region11: #{tpu_custom_call.1} parent=5 // pred_region
        %s257 = ssub.s32 %s21, 1
        // Predicated region
        $region13: #{tpu_custom_call.1} parent=11 // pred_check
          %p258 = pneg %p82
        $region14: #{tpu_custom_call.1} parent=11 // pred_check_branch
          %260 = sbr.rel (%p258) target = $region16
        $region15: #{tpu_custom_call.1} parent=11 // pred_region
          _
        $region16: #{tpu_custom_call.1} parent=11 // pred_fallthru
          _
        // Predicated region
        $region17: #{tpu_custom_call.1} parent=11 // pred_check
          %p261 = pneg %p103
        $region18: #{tpu_custom_call.1} parent=11 // pred_check_branch
          %263 = sbr.rel (%p261) target = $region20
        $region19: #{tpu_custom_call.1} parent=11 // pred_region
          _
        $region20: #{tpu_custom_call.1} parent=11 // pred_fallthru
          _
        // Predicated region
        $region21: #{tpu_custom_call.1} parent=11 // pred_check
          %p264 = pneg %p124
        $region22: #{tpu_custom_call.1} parent=11 // pred_check_branch
          %266 = sbr.rel (%p264) target = $region24
        $region23: #{tpu_custom_call.1} parent=11 // pred_region
          _
        $region24: #{tpu_custom_call.1} parent=11 // pred_fallthru
          _
        // Predicated region
        $region25: #{tpu_custom_call.1} parent=11 // pred_check
          %p267 = pneg %p145
        $region26: #{tpu_custom_call.1} parent=11 // pred_check_branch
          %269 = sbr.rel (%p267) target = $region28
        $region27: #{tpu_custom_call.1} parent=11 // pred_region
          _
        $region28: #{tpu_custom_call.1} parent=11 // pred_fallthru
          _
        // Predicated region
        $region29: #{tpu_custom_call.1} parent=11 // pred_check
          %p270 = pneg %p166
        $region30: #{tpu_custom_call.1} parent=11 // pred_check_branch
          %272 = sbr.rel (%p270) target = $region32
        $region31: #{tpu_custom_call.1} parent=11 // pred_region
          _
        $region32: #{tpu_custom_call.1} parent=11 // pred_fallthru
          _
        // Predicated region
        $region33: #{tpu_custom_call.1} parent=11 // pred_check
          %p273 = pneg %p187
        $region34: #{tpu_custom_call.1} parent=11 // pred_check_branch
          %275 = sbr.rel (%p273) target = $region36
        $region35: #{tpu_custom_call.1} parent=11 // pred_region
          _
        $region36: #{tpu_custom_call.1} parent=11 // pred_fallthru
          _
      $region12: #{tpu_custom_call.1} parent=5 // pred_fallthru
        _
      %p276 = scmp.lt.s32.totalorder %s21, 4
      // Predicated region
      $region37: #{tpu_custom_call.1} parent=5 // pred_check
        %p277 = pneg %p276
      $region38: #{tpu_custom_call.1} parent=5 // pred_check_branch
        %279 = sbr.rel (%p277) target = $region40
      $region39: #{tpu_custom_call.1} parent=5 // pred_region
        // Predicated region
        $region41: #{tpu_custom_call.1} parent=39 // pred_check
          %p280 = pneg %p55
        $region42: #{tpu_custom_call.1} parent=39 // pred_check_branch
          %282 = sbr.rel (%p280) target = $region44
        $region43: #{tpu_custom_call.1} parent=39 // pred_region
          %s283 = sand.u32 %s45, 1
          %s284 = sand.u32 %s45, 1
          %s285 = smul.addr %s284, 8
          %s286 = scalar_lea.vmem [#allocation3], %s285
          %s287 = smul.addr %s28, 4
          %s288 = sadd.s32 %s29, %s287
          %s289 = smul.addr %s288, 4
          %s290 = scalar_lea.vmem %s0, %s289
          // Predicated region
          $region45: #{tpu_custom_call.1} parent=43 // pred_check
            _
          $region46: #{tpu_custom_call.1} parent=43 // pred_check_branch
            %292 = sbr.rel (0) target = $region48
          $region47: #{tpu_custom_call.1} parent=43 // pred_region
            // Predicated region
            $region49: #{tpu_custom_call.1} parent=47 // pred_check
              _
            $region50: #{tpu_custom_call.1} parent=47 // pred_check_branch
              %294 = sbr.rel target = $region52
            $region51: #{tpu_custom_call.1} parent=47 // pred_region
              // Predicated region
              $region64: #{tpu_custom_call.1} parent=51 // pred_check
                _
              $region65: #{tpu_custom_call.1} parent=51 // pred_check_branch
                %312 = sbr.rel (0) target = $region67
              $region66: #{tpu_custom_call.1} parent=51 // pred_region
                loop: start=0, step=1, limit=1
                $region68: #{tpu_custom_call.1} parent=66 // loop_pre_header
                  _
                $region69: #{tpu_custom_call.1} parent=66 // loop_header
                  %s314 = sphi 0, %s318
                  %p315 = scmp.ge.s32.totalorder %s314, 1
                  %s319 = sphi %s290, %s290
                  %s320 = sphi %s286, %s286
                $region70: #{tpu_custom_call.1} parent=66 // loop_header_branch
                  %317 = sbr.rel (%p315) target = $region74
                $region71: #{tpu_custom_call.1} parent=66 // loop_body
                  _
                $region72: #{tpu_custom_call.1} parent=66 // loop_footer
                  %s318 = sadd.s32 1, %s314
                $region73: #{tpu_custom_call.1} parent=66 // loop_footer_branch
                  %313 = sbr.rel target = $region69
                $region74: #{tpu_custom_call.1} parent=66 // loop_exit
                  _
                %s322 = ssub.s32 16, 1
                loop: start=0, step=1, limit=1
                $region75: #{tpu_custom_call.1} parent=66 // loop_pre_header
                  _
                $region76: #{tpu_custom_call.1} parent=66 // loop_header
                  %s324 = sphi 0, %s328
                  %p325 = scmp.ge.s32.totalorder %s324, 1
                  %s329 = sphi %s290, %s290
                  %s330 = sphi %s286, %s286
                $region77: #{tpu_custom_call.1} parent=66 // loop_header_branch
                  %327 = sbr.rel (%p325) target = $region81
                $region78: #{tpu_custom_call.1} parent=66 // loop_body
                  %v331 = vld [vmem:[%s329] sm:%s322]
                  %332 = vst [vmem:[%s330] sm:%s322] %v331
                  %v333 = vld [vmem:[%s329 + $0x8] sm:%s322]
                  %334 = vst [vmem:[%s330 + $0x4] sm:%s322] %v333
                $region79: #{tpu_custom_call.1} parent=66 // loop_footer
                  %s328 = sadd.s32 1, %s324
                $region80: #{tpu_custom_call.1} parent=66 // loop_footer_branch
                  %323 = sbr.rel target = $region76
                $region81: #{tpu_custom_call.1} parent=66 // loop_exit
                  _
              $region67: #{tpu_custom_call.1} parent=51 // pred_fallthru
                _
            $region52: #{tpu_custom_call.1} parent=47 // pred_fallthru
              _
            // Predicated region
            $region53: #{tpu_custom_call.1} parent=47 // pred_check
              _
            $region54: #{tpu_custom_call.1} parent=47 // pred_check_branch
              %296 = sbr.rel (0) target = $region56
            $region55: #{tpu_custom_call.1} parent=47 // pred_region
              %s298 = ssub.s32 16, 1
              loop: start=0, step=1, limit=1
              $region57: #{tpu_custom_call.1} parent=55 // loop_pre_header
                _
              $region58: #{tpu_custom_call.1} parent=55 // loop_header
                %s300 = sphi 0, %s304
                %p301 = scmp.ge.s32.totalorder %s300, 1
                %s305 = sphi %s290, %s290
                %s306 = sphi %s286, %s286
              $region59: #{tpu_custom_call.1} parent=55 // loop_header_branch
                %303 = sbr.rel (%p301) target = $region63
              $region60: #{tpu_custom_call.1} parent=55 // loop_body
                %v307 = vld [vmem:[%s305] sm:%s298]
                %308 = vst [vmem:[%s306] sm:%s298] %v307
                %v309 = vld [vmem:[%s305 + $0x8] sm:%s298]
                %310 = vst [vmem:[%s306 + $0x4] sm:%s298] %v309
              $region61: #{tpu_custom_call.1} parent=55 // loop_footer
                %s304 = sadd.s32 1, %s300
              $region62: #{tpu_custom_call.1} parent=55 // loop_footer_branch
                %299 = sbr.rel target = $region58
              $region63: #{tpu_custom_call.1} parent=55 // loop_exit
                _
            $region56: #{tpu_custom_call.1} parent=47 // pred_fallthru
              _
          $region48: #{tpu_custom_call.1} parent=43 // pred_fallthru
            _
          %335 = vnop
        $region44: #{tpu_custom_call.1} parent=39 // pred_fallthru
          _
      $region40: #{tpu_custom_call.1} parent=5 // pred_fallthru
        _
      %p336 = scmp.le.s32.totalorder 1, %s21
      %p337 = scmp.lt.s32.totalorder %s21, 5
      %p338 = pnand %p336, %p337
      %p339 = pneg %p338
      // Predicated region
      $region82: #{tpu_custom_call.1} parent=5 // pred_check
        _
      $region83: #{tpu_custom_call.1} parent=5 // pred_check_branch
        %341 = sbr.rel (%p338) target = $region85
      $region84: #{tpu_custom_call.1} parent=5 // pred_region
        %s342 = ssub.s32 %s21, 1
        %s343 = sand.u32 %s48, 1
        %s344 = sand.u32 %s48, 1
        %s345 = smul.addr %s344, 8
        %s346 = scalar_lea.vmem [#allocation3], %s345
        // Predicated region
        $region86: #{tpu_custom_call.1} parent=84 // pred_check
          %p347 = pneg %p61
        $region87: #{tpu_custom_call.1} parent=84 // pred_check_branch
          %349 = sbr.rel (%p347) target = $region89
        $region88: #{tpu_custom_call.1} parent=84 // pred_region
          _
        $region89: #{tpu_custom_call.1} parent=84 // pred_fallthru
          _
        %s350 = sand.u32 %s48, 1
        %s351 = sand.u32 %s48, 1
        %s352 = smul.addr %s351, 8
        %s353 = scalar_lea.vmem [#allocation3], %s352
        %p354 = pneg %p61
        %p355 = pneg %p58
        %p356 = pneg %p82
        %p357 = pneg %p79
        %p358 = pneg %p103
        %p359 = pneg %p100
        %p360 = pneg %p124
        %p361 = pneg %p121
        %p362 = pneg %p145
        %p363 = pneg %p142
        %p364 = pneg %p166
        %p365 = pneg %p163
        %p366 = pneg %p187
        %p367 = pneg %p184
        %p368 = pneg %p215
        %p369 = pneg %p212
        %s370 = sand.u32 %s202, 1
        %s371 = scalar_lea.sflag [#allocation5], %s370
        %s372 = sand.u32 %s202, 1
        %s373 = smul.addr %s372, 16
        %s374 = scalar_lea.vmem [#allocation4], %s373
        %p375 = pneg %p243
        %p376 = pneg %p240
        %s377 = sand.u32 %s230, 1
        %s378 = scalar_lea.sflag [#allocation7], %s377
        %s379 = sand.u32 %s230, 1
        %s380 = smul.addr %s379, 16
        %s381 = scalar_lea.vmem [#allocation6], %s380
        %p383 = scmp.eq.s32.totalorder %s31, 0
        // Predicated region
        $region90: #{tpu_custom_call.1} parent=84 // pred_check
          %p384 = pneg %p383
        $region91: #{tpu_custom_call.1} parent=84 // pred_check_branch
          %386 = sbr.rel (%p384) target = $region93
        $region92: #{tpu_custom_call.1} parent=84 // pred_region
          %387 = vst [vmem:[#allocation2] sm:$0xf] 0
          %388 = vst [vmem:[#allocation2 + $0x4] sm:$0xf] 0
        $region93: #{tpu_custom_call.1} parent=84 // pred_fallthru
          _
        %v389 = vld [vmem:[%s346] sm:$0xf]
        %v390 = vld [vmem:[%s346 + $0x4] sm:$0xf]
        %v391 = vld [vmem:[#allocation2] sm:$0xf]
        %v392 = vld [vmem:[#allocation2 + $0x4] sm:$0xf]
        %v395 = vunpack.c.l.b16 %v391
        %v396 = vunpack.c.l.b16 %v392
        %v397 = vpack.c.b16 %v396, %v395
        %398 = vrot.lane.b32.xlu0 %v397, 4
        %v399 = vpop.permute.xlu0 %398
        %v402 = vunpack.c.l.b16 %v389
        %v403 = vunpack.c.l.b16 %v390
        %v404 = vpack.c.b16 %v403, %v402
        %405 = vrot.lane.b32.xlu0 %v404, 4
        %v406 = vpop.permute.xlu0 %405
        %vm407 = vcmask 31744
        %v410 = vsel %vm407, %v399, %v406
        %v413 = vld [vmem:[%s1] sm:$0xf]
        %v414 = vld [vmem:[%s1 + $0x4] sm:$0xf]
        %v415 = vld [vmem:[%s1 + $0x8] sm:$0xf]
        %v416 = vld [vmem:[%s1 + $0xc] sm:$0xf]
        %v417 = vld [vmem:[%s2] sm:$0xff]
        %v418 = vld [vmem:[%s2 + $0x8] sm:$0xff]
        %v419 = vld [vmem:[%s2 + $0x10] sm:$0xff]
        %v420 = vld [vmem:[%s2 + $0x18] sm:$0xff]
        %422 = vset.pattern.permute.xlu0 0
        %423 = vperm.xlu0 %422, %v417
        %v424 = vpop.permute.xlu0 %423
        %427 = vset.pattern.permute.xlu0 0
        %428 = vperm.xlu0 %427, %v418
        %v429 = vpop.permute.xlu0 %428
        %432 = vset.pattern.permute.xlu0 0
        %433 = vperm.xlu0 %432, %v419
        %v434 = vpop.permute.xlu0 %433
        %437 = vset.pattern.permute.xlu0 0
        %438 = vperm.xlu0 %437, %v420
        %v439 = vpop.permute.xlu0 %438
        %v445 = vunpack.c.l.b16 %v413
        %v446 = vunpack.c.l.b16 %v414
        %v447 = vunpack.c.l.b16 %v415
        %v448 = vunpack.c.l.b16 %v416
        %v449 = vpack.c.b16 %v446, %v445
        %v450 = vpack.c.b16 %v448, %v447
        %vm451 = vcmask 261120
        %v453 = vsel %vm451, %v449, 0
        %v456 = vsel %vm451, %v450, 0
        %458 = vmatprep.subr.bf16.mxu0 0
        %459 = vmatpush1.bf16.msra.mxu0 0
        %460 = vmatprep.subr.bf16.mxu0 0
        %461 = vmatpush1.bf16.msra.mxu0 0
        %462 = vmatprep.subr.bf16.mxu0 0
        %463 = vmatpush1.bf16.msra.mxu0 0
        %464 = vmatprep.subr.bf16.mxu0 0
        %465 = vmatpush1.bf16.msra.mxu0 0
        %466 = vmatprep.subr.bf16.mxu0 0
        %467 = vmatpush1.bf16.msra.mxu0 0
        %468 = vmatprep.subr.bf16.mxu0 0
        %469 = vmatpush1.bf16.msra.mxu0 0
        %470 = vmatprep.subr.bf16.mxu0 0
        %471 = vmatpush1.bf16.msra.mxu0 %v404
        %472 = vmatprep.subr.bf16.mxu0 0
        %473 = vmatpush1.bf16.msra.mxu0 %v410
        %474 = vmatprep.subr.bf16.mxu0 0
        %475 = vmatpush2.bf16.msra.mxu0 0
        %476 = vmatprep.subr.bf16.mxu0 0
        %477 = vmatpush2.bf16.msra.mxu0 0
        %478 = vmatprep.subr.bf16.mxu0 0
        %479 = vmatpush2.bf16.msra.mxu0 0
        %480 = vmatprep.subr.bf16.mxu0 0
        %481 = vmatpush2.bf16.msra.mxu0 0
        %482 = vmatprep.subr.bf16.mxu0 0
        %483 = vmatpush2.bf16.msra.mxu0 0
        %484 = vmatprep.subr.bf16.mxu0 0
        %485 = vmatpush2.bf16.msra.mxu0 0
        %486 = vmatprep.subr.bf16.mxu0 0
        %487 = vmatpush2.bf16.msra.mxu0 0
        %488 = vmatprep.subr.bf16.mxu0 0
        %489 = vmatpush2.bf16.msra.mxu0 0
        %490 = vmatprep.mubr.bf16.mxu0 0
        %491 = vmatmul.mubr.bf16.gmra.mxu0 %v453
        %v492 = vpop.f32.mrf.mxu0
        %v493 = vadd.f32 %v424, %v492
        %v494 = vpop.f32.mrf.mxu0
        %v495 = vpop.f32.mrf.mxu0
        %v496 = vadd.f32 %v429, %v495
        %v497 = vpop.f32.mrf.mxu0
        %498 = vmatprep.mubr.bf16.mxu0 0
        %499 = vmatmul.mubr.bf16.gmra.mxu0 %v456
        %v500 = vpop.f32.mrf.mxu0
        %v501 = vadd.f32 %v434, %v500
        %v502 = vpop.f32.mrf.mxu0
        %v503 = vpop.f32.mrf.mxu0
        %v504 = vadd.f32 %v439, %v503
        %v505 = vpop.f32.mrf.mxu0
        %506 = vdwg.mxu0
        %v507 = vld [vmem:[%s3] sm:$0xf]
        %v508 = vld [vmem:[%s3 + $0x4] sm:$0xf]
        %v509 = vld [vmem:[%s3 + $0x8] sm:$0xf]
        %v510 = vld [vmem:[%s3 + $0xc] sm:$0xf]
        %v511 = vpack.c.bf16 %v496, %v493
        %v512 = vpack.c.bf16 %v504, %v501
        %v513 = vld [vmem:[%s4] sm:$0xff]
        %v514 = vld [vmem:[%s4 + $0x8] sm:$0xff]
        %v515 = vld [vmem:[%s4 + $0x10] sm:$0xff]
        %v516 = vld [vmem:[%s4 + $0x18] sm:$0xff]
        %518 = vset.pattern.permute.xlu0 0
        %519 = vperm.xlu0 %518, %v513
        %v520 = vpop.permute.xlu0 %519
        %523 = vset.pattern.permute.xlu0 0
        %524 = vperm.xlu0 %523, %v514
        %v525 = vpop.permute.xlu0 %524
        %528 = vset.pattern.permute.xlu0 0
        %529 = vperm.xlu0 %528, %v515
        %v530 = vpop.permute.xlu0 %529
        %533 = vset.pattern.permute.xlu0 0
        %534 = vperm.xlu0 %533, %v516
        %v535 = vpop.permute.xlu0 %534
        %v541 = vunpack.c.l.b16 %v507
        %v542 = vunpack.c.l.b16 %v508
        %v543 = vunpack.c.l.b16 %v509
        %v544 = vunpack.c.l.b16 %v510
        %v545 = vpack.c.b16 %v542, %v541
        %v546 = vpack.c.b16 %v544, %v543
        %v548 = vsel %vm451, %v545, 0
        %v551 = vsel %vm451, %v546, 0
        %553 = vmatprep.subr.bf16.mxu0 0
        %554 = vmatpush1.bf16.msra.mxu0 0
        %555 = vmatprep.subr.bf16.mxu0 0
        %556 = vmatpush1.bf16.msra.mxu0 0
        %557 = vmatprep.subr.bf16.mxu0 0
        %558 = vmatpush1.bf16.msra.mxu0 0
        %559 = vmatprep.subr.bf16.mxu0 0
        %560 = vmatpush1.bf16.msra.mxu0 0
        %561 = vmatprep.subr.bf16.mxu0 0
        %562 = vmatpush1.bf16.msra.mxu0 0
        %563 = vmatprep.subr.bf16.mxu0 0
        %564 = vmatpush1.bf16.msra.mxu0 0
        %565 = vmatprep.subr.bf16.mxu0 0
        %566 = vmatpush1.bf16.msra.mxu0 %v512
        %567 = vmatprep.subr.bf16.mxu0 0
        %568 = vmatpush1.bf16.msra.mxu0 %v511
        %569 = vmatprep.subr.bf16.mxu0 0
        %570 = vmatpush2.bf16.msra.mxu0 0
        %571 = vmatprep.subr.bf16.mxu0 0
        %572 = vmatpush2.bf16.msra.mxu0 0
        %573 = vmatprep.subr.bf16.mxu0 0
        %574 = vmatpush2.bf16.msra.mxu0 0
        %575 = vmatprep.subr.bf16.mxu0 0
        %576 = vmatpush2.bf16.msra.mxu0 0
        %577 = vmatprep.subr.bf16.mxu0 0
        %578 = vmatpush2.bf16.msra.mxu0 0
        %579 = vmatprep.subr.bf16.mxu0 0
        %580 = vmatpush2.bf16.msra.mxu0 0
        %581 = vmatprep.subr.bf16.mxu0 0
        %582 = vmatpush2.bf16.msra.mxu0 0
        %583 = vmatprep.subr.bf16.mxu0 0
        %584 = vmatpush2.bf16.msra.mxu0 0
        %585 = vmatprep.mubr.bf16.mxu0 0
        %586 = vmatmul.mubr.bf16.gmra.mxu0 %v548
        %v587 = vpop.f32.mrf.mxu0
        %v588 = vadd.f32 %v520, %v587
        %v589 = vpop.f32.mrf.mxu0
        %v590 = vpop.f32.mrf.mxu0
        %v591 = vadd.f32 %v525, %v590
        %v592 = vpop.f32.mrf.mxu0
        %593 = vmatprep.mubr.bf16.mxu0 0
        %594 = vmatmul.mubr.bf16.gmra.mxu0 %v551
        %v595 = vpop.f32.mrf.mxu0
        %v596 = vadd.f32 %v530, %v595
        %v597 = vpop.f32.mrf.mxu0
        %v598 = vpop.f32.mrf.mxu0
        %v599 = vadd.f32 %v535, %v598
        %v600 = vpop.f32.mrf.mxu0
        %601 = vdwg.mxu0
        %v602 = vtanh.pop %v588
        %v603 = vtanh.pop %v591
        %v604 = vxor.u32 %v596, 2147483648
        %v605 = vxor.u32 %v599, 2147483648
        %v606 = vmul.f32 %v604, 1.442695
        %v607 = vpow.pop %v606
        %v608 = vmul.f32 %v605, 1.442695
        %v609 = vpow.pop %v608
        %v610 = vadd.f32 %v607, 1.0
        %v611 = vadd.f32 %v609, 1.0
        %v612 = vrcp.pop %v610
        %v613 = vmul.f32 1.0, %v612
        %v614 = vrcp.pop %v611
        %v615 = vmul.f32 1.0, %v614
        %v616 = vmul.f32 %v602, %v613
        %v617 = vmul.f32 %v603, %v615
        %v618 = vld [vmem:[%s5] sm:$0xf]
        %v619 = vld [vmem:[%s5 + $0x4] sm:$0xf]
        %v620 = vld [vmem:[%s5 + $0x8] sm:$0xf]
        %v621 = vld [vmem:[%s5 + $0xc] sm:$0xf]
        %v622 = vpack.c.bf16 %v617, %v616
        %v623 = vld [vmem:[%s6] sm:$0xff]
        %v624 = vld [vmem:[%s6 + $0x8] sm:$0xff]
        %v625 = vld [vmem:[%s6 + $0x10] sm:$0xff]
        %v626 = vld [vmem:[%s6 + $0x18] sm:$0xff]
        %628 = vset.pattern.permute.xlu0 0
        %629 = vperm.xlu0 %628, %v623
        %v630 = vpop.permute.xlu0 %629
        %633 = vset.pattern.permute.xlu0 0
        %634 = vperm.xlu0 %633, %v624
        %v635 = vpop.permute.xlu0 %634
        %638 = vset.pattern.permute.xlu0 0
        %639 = vperm.xlu0 %638, %v625
        %v640 = vpop.permute.xlu0 %639
        %643 = vset.pattern.permute.xlu0 0
        %644 = vperm.xlu0 %643, %v626
        %v645 = vpop.permute.xlu0 %644
        %v651 = vunpack.c.l.b16 %v618
        %v652 = vunpack.c.l.b16 %v619
        %v653 = vunpack.c.l.b16 %v620
        %v654 = vunpack.c.l.b16 %v621
        %v655 = vpack.c.b16 %v652, %v651
        %v656 = vpack.c.b16 %v654, %v653
        %vm657 = vcmask 130048
        %v659 = vsel %vm657, %v655, 0
        %v662 = vsel %vm657, %v656, 0
        %664 = vmatprep.subr.bf16.mxu0 0
        %665 = vmatpush1.bf16.msra.mxu0 0
        %666 = vmatprep.subr.bf16.mxu0 0
        %667 = vmatpush1.bf16.msra.mxu0 0
        %668 = vmatprep.subr.bf16.mxu0 0
        %669 = vmatpush1.bf16.msra.mxu0 0
        %670 = vmatprep.subr.bf16.mxu0 0
        %671 = vmatpush1.bf16.msra.mxu0 0
        %672 = vmatprep.subr.bf16.mxu0 0
        %673 = vmatpush1.bf16.msra.mxu0 0
        %674 = vmatprep.subr.bf16.mxu0 0
        %675 = vmatpush1.bf16.msra.mxu0 0
        %676 = vmatprep.subr.bf16.mxu0 0
        %677 = vmatpush1.bf16.msra.mxu0 0
        %678 = vmatprep.subr.bf16.mxu0 0
        %679 = vmatpush1.bf16.msra.mxu0 %v622
        %680 = vmatprep.subr.bf16.mxu0 0
        %681 = vmatpush2.bf16.msra.mxu0 0
        %682 = vmatprep.subr.bf16.mxu0 0
        %683 = vmatpush2.bf16.msra.mxu0 0
        %684 = vmatprep.subr.bf16.mxu0 0
        %685 = vmatpush2.bf16.msra.mxu0 0
        %686 = vmatprep.subr.bf16.mxu0 0
        %687 = vmatpush2.bf16.msra.mxu0 0
        %688 = vmatprep.subr.bf16.mxu0 0
        %689 = vmatpush2.bf16.msra.mxu0 0
        %690 = vmatprep.subr.bf16.mxu0 0
        %691 = vmatpush2.bf16.msra.mxu0 0
        %692 = vmatprep.subr.bf16.mxu0 0
        %693 = vmatpush2.bf16.msra.mxu0 0
        %694 = vmatprep.subr.bf16.mxu0 0
        %695 = vmatpush2.bf16.msra.mxu0 0
        %696 = vmatprep.mubr.bf16.mxu0 0
        %697 = vmatmul.mubr.bf16.gmra.mxu0 %v659
        %v698 = vpop.f32.mrf.mxu0
        %v699 = vadd.f32 %v630, %v698
        %v700 = vpop.f32.mrf.mxu0
        %v701 = vpop.f32.mrf.mxu0
        %v702 = vadd.f32 %v635, %v701
        %v703 = vpop.f32.mrf.mxu0
        %704 = vmatprep.mubr.bf16.mxu0 0
        %705 = vmatmul.mubr.bf16.gmra.mxu0 %v662
        %v706 = vpop.f32.mrf.mxu0
        %v707 = vadd.f32 %v640, %v706
        %v708 = vpop.f32.mrf.mxu0
        %v709 = vpop.f32.mrf.mxu0
        %v710 = vadd.f32 %v645, %v709
        %v711 = vpop.f32.mrf.mxu0
        %712 = vdwg.mxu0
        %713 = vst [vmem:[%s381] sm:$0xff] %v699
        %714 = vst [vmem:[%s381 + $0x8] sm:$0xff] %v702
        %v715 = vunpack.c.l.bf16 %v389
        %v716 = vunpack.c.l.bf16 %v390
        %v717 = vadd.f32 %v707, %v715
        %v718 = vadd.f32 %v710, %v716
        %719 = vst [vmem:[%s374] sm:$0xff] %v717
        %720 = vst [vmem:[%s374 + $0x8] sm:$0xff] %v718
        %721 = vst [vmem:[#allocation2] sm:$0xf] %v389
        %722 = vst [vmem:[#allocation2 + $0x4] sm:$0xf] %v390
        %s723 = sand.u32 %s202, 1
        %s724 = scalar_lea.sflag [#allocation5], %s723
        %s725 = sand.u32 %s202, 1
        %s726 = smul.addr %s725, 16
        %s727 = scalar_lea.vmem [#allocation4], %s726
        %s728 = sand.u32 %s230, 1
        %s729 = scalar_lea.sflag [#allocation7], %s728
        %s730 = sand.u32 %s230, 1
        %s731 = smul.addr %s730, 16
        %s732 = scalar_lea.vmem [#allocation6], %s731
        // Predicated region
        $region94: #{tpu_custom_call.1} parent=84 // pred_check
          %p733 = pneg %p212
        $region95: #{tpu_custom_call.1} parent=84 // pred_check_branch
          %735 = sbr.rel (%p733) target = $region97
        $region96: #{tpu_custom_call.1} parent=84 // pred_region
          %s737 = ssub.s32 256, 256
          %738 = vsyncadd %s724, %s737
          %s739 = smul.addr %s30, 4
          %s740 = sadd.s32 %s31, %s739
          %s741 = smul.addr %s740, 128
          %s742 = scalar_lea.hbm %s7, %s741
          %s743 = sshll.u32 %s727, 4
          %s744 = int_to_ptr.vmem [resolvable:$true] %s743
          %749 = dma.vmem_to_hbm [thread:$0]  %s744, 256, %s742, %s724, 128, 256, 8
        $region97: #{tpu_custom_call.1} parent=84 // pred_fallthru
          _
        // Predicated region
        $region98: #{tpu_custom_call.1} parent=84 // pred_check
          %p750 = pneg %p240
        $region99: #{tpu_custom_call.1} parent=84 // pred_check_branch
          %752 = sbr.rel (%p750) target = $region101
        $region100: #{tpu_custom_call.1} parent=84 // pred_region
          %s754 = ssub.s32 256, 256
          %755 = vsyncadd %s729, %s754
          %s756 = smul.addr %s30, 4
          %s757 = sadd.s32 %s31, %s756
          %s758 = smul.addr %s757, 128
          %s759 = scalar_lea.hbm %s8, %s758
          %s760 = sshll.u32 %s732, 4
          %s761 = int_to_ptr.vmem [resolvable:$true] %s760
          %766 = dma.vmem_to_hbm [thread:$0]  %s761, 256, %s759, %s729, 128, 256, 8
        $region101: #{tpu_custom_call.1} parent=84 // pred_fallthru
          _
      $region85: #{tpu_custom_call.1} parent=5 // pred_fallthru
        _
      %p767 = scmp.le.s32.totalorder 2, %s21
      // Predicated region
      $region102: #{tpu_custom_call.1} parent=5 // pred_check
        %p768 = pneg %p767
      $region103: #{tpu_custom_call.1} parent=5 // pred_check_branch
        %770 = sbr.rel (%p768) target = $region105
      $region104: #{tpu_custom_call.1} parent=5 // pred_region
        %s771 = ssub.s32 %s21, 2
        // Predicated region
        $region106: #{tpu_custom_call.1} parent=104 // pred_check
          %p772 = pneg %p218
        $region107: #{tpu_custom_call.1} parent=104 // pred_check_branch
          %774 = sbr.rel (%p772) target = $region109
        $region108: #{tpu_custom_call.1} parent=104 // pred_region
          %s775 = sand.u32 %s203, 1
          %s776 = scalar_lea.sflag [#allocation5], %s775
          %s777 = sand.u32 %s203, 1
          %s778 = smul.addr %s777, 16
          %s779 = scalar_lea.vmem [#allocation4], %s778
          %780 = dma.done %s776, 256
        $region109: #{tpu_custom_call.1} parent=104 // pred_fallthru
          _
        // Predicated region
        $region110: #{tpu_custom_call.1} parent=104 // pred_check
          %p781 = pneg %p246
        $region111: #{tpu_custom_call.1} parent=104 // pred_check_branch
          %783 = sbr.rel (%p781) target = $region113
        $region112: #{tpu_custom_call.1} parent=104 // pred_region
          %s784 = sand.u32 %s231, 1
          %s785 = scalar_lea.sflag [#allocation7], %s784
          %s786 = sand.u32 %s231, 1
          %s787 = smul.addr %s786, 16
          %s788 = scalar_lea.vmem [#allocation6], %s787
          %789 = dma.done %s785, 256
        $region113: #{tpu_custom_call.1} parent=104 // pred_fallthru
          _
      $region105: #{tpu_custom_call.1} parent=5 // pred_fallthru
        _
    $region6: #{tpu_custom_call.1} parent=1 // loop_footer
      %s25 = sadd.s32 1, %s21
    $region7: #{tpu_custom_call.1} parent=1 // loop_footer_branch
      %20 = sbr.rel target = $region3
    $region8: #{tpu_custom_call.1} parent=1 // loop_exit
      _
    %790 = vsyncpa [#allocation5], 1
    %s791 = scalar_lea.sflag [#allocation5], 1
    %792 = vsyncpa %s791, 1
    %793 = vsyncpa [#allocation7], 1
    %s794 = scalar_lea.sflag [#allocation7], 1
    %795 = vsyncpa %s794, 1

</llo_original>
